<compile_context>
chip_gen: v5e
topology: v5e:2x2
jax: 0.10.0
libtpu: 0.0.40
codegen_flags: <defaults>
</compile_context>

<pallas_src>
import functools

import jax
import jax.numpy as jnp
from jax.experimental import pallas as pl
from jax.experimental.pallas import tpu as pltpu


def _round_up(x, m):
    return ((x + m - 1) // m) * m


def _pick_group(batch, cap=8):
    """Largest divisor of `batch` that is <= cap and keeps >= ~4 grid steps."""
    limit = max(1, min(cap, batch // 4))
    g = 1
    for cand in range(1, limit + 1):
        if batch % cand == 0:
            g = cand
    return g


def _vmem_limit_bytes():
    try:
        cap = pltpu.get_tpu_info().vmem_capacity_bytes
    except Exception:
        cap = 128 * 1024 * 1024
    return int(min(0.45 * cap, 100 * 1024 * 1024))


def rela_kernel(img_ref, qb_ref, w_i_ref, w_j_ref, a2_ref, b2_ref,
                w1f_ref, b1f_ref, w2f_ref, b2f_ref, out_ref, *, eps, outdim):
    gb = img_ref.shape[0]                      # batch elements in this block
    d_img = img_ref.shape[2]
    out_pad = a2_ref.shape[-1]                 # 128-multiple
    rows = gb * 34

    img = img_ref[...].astype(jnp.bfloat16)    # (gb, 35, d_img) loaded ONCE
    x_i = img[:, 0:34, :].reshape(rows, d_img)
    x_j = img[:, 1:35, :].reshape(rows, d_img)

    # Fused first layer: columns = [rela_node | pad][rela[0] | rela[1] | pad].
    # Question-vector contribution + all biases arrive precomputed per batch (qb).
    y = jnp.dot(x_i, w_i_ref[...], preferred_element_type=jnp.float32)
    y = y + jnp.dot(x_j, w_j_ref[...], preferred_element_type=jnp.float32)
    y = jnp.maximum(y.reshape(gb, 34, 2 * out_pad) + qb_ref[...], 0.0)

    r_nodes = y[:, :, :out_pad]                # lane-aligned splits
    r_cat = y[:, :, out_pad:]

    # LayerNorm exactly as the PyTorch module: unbiased std (N-1), eps on std.
    # One-pass sums; padded columns of r_cat are exactly zero so they drop out.
    s1 = jnp.sum(r_cat, axis=-1, keepdims=True)
    s2 = jnp.sum(r_cat * r_cat, axis=-1, keepdims=True)
    mean = s1 * (1.0 / float(outdim))
    var = (s2 - s1 * mean) * (1.0 / float(outdim - 1))
    std = jnp.sqrt(jnp.maximum(var, 0.0))
    inv = pl.reciprocal(std + eps, approx=True)          # EUP slot
    ln = a2_ref[...] * ((r_cat - mean) * inv) + b2_ref[...]

    r_feature = ln + r_nodes                             # (gb, 34, out_pad) f32

    # PositionwiseFeedForward (dropout = identity) + residual.
    rf2 = r_feature.reshape(rows, out_pad).astype(jnp.bfloat16)
    h = jnp.maximum(
        jnp.dot(rf2, w1f_ref[...], preferred_element_type=jnp.float32)
        + b1f_ref[...], 0.0)
    ff = jnp.dot(h.astype(jnp.bfloat16), w2f_ref[...],
                 preferred_element_type=jnp.float32) + b2f_ref[...]

    out_ref[...] = (ff.reshape(gb, 34, out_pad) + r_feature).astype(out_ref.dtype)


def prepare_params(params, *, d_img, d_qst):
    """One-time weight split / lane padding / bf16 casting."""
    outdim = int(params["w_node"].shape[1])
    hiddim = int(params["w1f"].shape[1])
    out_pad = _round_up(outdim, 128)
    hid_pad = _round_up(hiddim, 128)

    def pad_cols(w, to):
        return jnp.pad(w, ((0, 0), (0, to - w.shape[1])))

    # Fused first-layer weight, columns: [rela_node | 0][rela[0] | rela[1] | 0]
    w_full = jnp.concatenate(
        [pad_cols(params["w_node"], out_pad),
         pad_cols(jnp.concatenate([params["w0"], params["w1"]], axis=1), out_pad)],
        axis=1).astype(jnp.bfloat16)                     # (indim, 2*out_pad)
    b_full = jnp.concatenate(
        [jnp.pad(params["b_node"], (0, out_pad - outdim)),
         jnp.pad(jnp.concatenate([params["b0"], params["b1"]]),
                 (0, out_pad - outdim))]).astype(jnp.float32)

    return {
        "w_i": w_full[:d_img],                           # (d_img, 2*out_pad) bf16
        "w_j": w_full[d_img:2 * d_img],                  # (d_img, 2*out_pad) bf16
        "w_q": w_full[2 * d_img:],                       # (d_qst, 2*out_pad) bf16
        "b_in": b_full[None, :],                         # (1, 2*out_pad) f32
        "a2": jnp.pad(params["a2"], (0, out_pad - outdim)
                      ).reshape(1, -1).astype(jnp.float32),
        "b2": jnp.pad(params["b2"], (0, out_pad - outdim)
                      ).reshape(1, -1).astype(jnp.float32),
        "w1f": jnp.pad(params["w1f"], ((0, out_pad - outdim),
                                       (0, hid_pad - hiddim))).astype(jnp.bfloat16),
        "b1f": jnp.pad(params["b1f"], (0, hid_pad - hiddim)
                       ).reshape(1, -1).astype(jnp.float32),
        "w2f": jnp.pad(params["w2f"], ((0, hid_pad - hiddim),
                                       (0, out_pad - outdim))).astype(jnp.bfloat16),
        "b2f": jnp.pad(params["b2f"], (0, out_pad - outdim)
                       ).reshape(1, -1).astype(jnp.float32),
        "outdim": outdim, "out_pad": out_pad, "hid_pad": hid_pad,
        "d_img": d_img, "d_qst": d_qst,
    }


def rela_module_forward(img, qst, prep, *, eps=1e-6, max_batch_tile=8):
    """img: (B, K>=35, d_img)  qst: (B, d_qst)  ->  (B, 34, outdim) bf16."""
    B = img.shape[0]
    outdim, out_pad = prep["outdim"], prep["out_pad"]
    d_img = prep["d_img"]
    assert img.shape[2] == d_img and qst.shape[-1] == prep["d_qst"]

    img35 = img if img.shape[1] == 35 else img[:, :35, :]   # only 35 nodes used

    # Question projection + all first-layer biases, once per batch element
    # (previously replicated 34x into x_con and recomputed 34x).
    qb = jnp.dot(qst.astype(jnp.bfloat16), prep["w_q"],
                 preferred_element_type=jnp.float32) + prep["b_in"]
    qb = qb.reshape(B, 1, 2 * out_pad)

    gb = _pick_group(B, max_batch_tile)
    grid = (B // gb,)
    vmem_limit = _vmem_limit_bytes()

    def run(use_buffered):
        def resident(arr):
            # Same block every grid step -> stays VMEM-resident; Buffered(1)
            # drops the (useless) second buffer to halve weight VMEM footprint.
            kwargs = {}
            if use_buffered:
                kwargs["pipeline_mode"] = pl.Buffered(1)
            return pl.BlockSpec(arr.shape, lambda b: (0,) * arr.ndim, **kwargs)

        return pl.pallas_call(
            functools.partial(rela_kernel, eps=eps, outdim=outdim),
            out_shape=jax.ShapeDtypeStruct((B, 34, out_pad), jnp.bfloat16),
            grid=grid,
            in_specs=[
                pl.BlockSpec((gb, 35, d_img), lambda b: (b, 0, 0)),
                pl.BlockSpec((gb, 1, 2 * out_pad), lambda b: (b, 0, 0)),
                resident(prep["w_i"]),
                resident(prep["w_j"]),
                resident(prep["a2"]),
                resident(prep["b2"]),
                resident(prep["w1f"]),
                resident(prep["b1f"]),
                resident(prep["w2f"]),
                resident(prep["b2f"]),
            ],
            out_specs=pl.BlockSpec((gb, 34, out_pad), lambda b: (b, 0, 0)),
            compiler_params=pltpu.CompilerParams(
                dimension_semantics=("parallel",),
                vmem_limit_bytes=vmem_limit,
            ),
        )(img35, qb, prep["w_i"], prep["w_j"], prep["a2"], prep["b2"],
          prep["w1f"], prep["b1f"], prep["w2f"], prep["b2f"])

    try:
        out = run(use_buffered=True)
    except Exception:
        # pipeline_mode / pl.Buffered not supported on this jax version.
        out = run(use_buffered=False)

    # Padded feature columns are exactly zero; drop them (lane-only slice).
    return out[..., :outdim] if out_pad != outdim else out


def _reference_forward(img, qst, params, eps=1e-6):
    """Pure-JAX reference mirroring the PyTorch forward (dropout = identity),
    with bf16 matmul operands / f32 accumulation to match the kernel."""
    B = img.shape[0]
    q_rep = jnp.broadcast_to(qst[:, None, :], (B, 34, qst.shape[-1]))
    x_con = jnp.concatenate([img[:, 0:34], img[:, 1:35], q_rep], axis=2)

    def mm(a, w):
        return jnp.dot(a.astype(jnp.bfloat16), w.astype(jnp.bfloat16),
                       preferred_element_type=jnp.float32)

    r_nodes = jax.nn.relu(mm(x_con, params["w_node"]) + params["b_node"])
    r0 = jax.nn.relu(mm(x_con, params["w0"]) + params["b0"])
    r1 = jax.nn.relu(mm(x_con, params["w1"]) + params["b1"])
    r_cat = jnp.concatenate([r0, r1], axis=2)
    mean = r_cat.mean(-1, keepdims=True)
    std = jnp.sqrt(((r_cat - mean) ** 2).sum(-1, keepdims=True)
                   / (r_cat.shape[-1] - 1))
    ln = params["a2"] * (r_cat - mean) / (std + eps) + params["b2"]
    r_feature = ln + r_nodes
    h = jax.nn.relu(mm(r_feature, params["w1f"]) + params["b1f"])
    ff = mm(h, params["w2f"]) + params["b2f"]
    return ff + r_feature


def make_params(key, indim, hiddim, outdim):
    d_k = outdim // 2
    keys = jax.random.split(key, 10)
    s = 0.1
    return {
        "w_node": s * jax.random.normal(keys[0], (indim, outdim), jnp.float32),
        "b_node": s * jax.random.normal(keys[1], (outdim,), jnp.float32),
        "w0": s * jax.random.normal(keys[2], (indim, d_k), jnp.float32),
        "b0": s * jax.random.normal(keys[3], (d_k,), jnp.float32),
        "w1": s * jax.random.normal(keys[4], (indim, d_k), jnp.float32),
        "b1": s * jax.random.normal(keys[5], (d_k,), jnp.float32),
        "a2": jnp.ones((outdim,), jnp.float32),
        "b2": jnp.zeros((outdim,), jnp.float32),
        "w1f": s * jax.random.normal(keys[6], (outdim, hiddim), jnp.float32),
        "b1f": s * jax.random.normal(keys[7], (hiddim,), jnp.float32),
        "w2f": s * jax.random.normal(keys[8], (hiddim, outdim), jnp.float32),
        "b2f": s * jax.random.normal(keys[9], (outdim,), jnp.float32),
    }


if __name__ == "__main__":
    # Small shapes consistent with the forward: img has >= 35 "nodes";
    # indim of the first Linear = 2*d_img + d_qst.
    B, K, d_img, d_qst = 2, 35, 16, 16
    indim = 2 * d_img + d_qst     # 48
    hiddim = 32
    outdim = 32                   # h=2 -> d_k = 16

    key = jax.random.PRNGKey(0)
    k_img, k_qst, k_par = jax.random.split(key, 3)
    img = jax.random.normal(k_img, (B, K, d_img), jnp.float32)
    qst = jax.random.normal(k_qst, (B, d_qst), jnp.float32)
    params = make_params(k_par, indim, hiddim, outdim)
    prep = prepare_params(params, d_img=d_img, d_qst=d_qst)

    out = rela_module_forward(img, qst, prep)
    out = jax.block_until_ready(out)

    ref = _reference_forward(img, qst, params)
    assert out.shape == (B, 34, outdim)
    # TODO(synk): train-mode dropout and the debug print() are intentionally
    # omitted (eval-mode identity / no-op).
    err = float(jnp.max(jnp.abs(out.astype(jnp.float32) - ref)
                        / (1.0 + jnp.abs(ref))))
    assert err < 2e-2, f"mismatch vs JAX reference: max rel err = {err}"

    print("KERNEL_OK")
</pallas_src>

<mosaic_0001>
module attributes {stable_mosaic.version = 11 : i64} {
  func.func @rela_kernel(%arg0: i32, %arg1: memref<1x35x16xf32, #tpu.memory_space<vmem>>, %arg2: memref<1x1x256xf32, #tpu.memory_space<vmem>>, %arg3: memref<16x256xbf16, #tpu.memory_space<vmem>>, %arg4: memref<16x256xbf16, #tpu.memory_space<vmem>>, %arg5: memref<1x128xf32, #tpu.memory_space<vmem>>, %arg6: memref<1x128xf32, #tpu.memory_space<vmem>>, %arg7: memref<128x128xbf16, #tpu.memory_space<vmem>>, %arg8: memref<1x128xf32, #tpu.memory_space<vmem>>, %arg9: memref<128x128xbf16, #tpu.memory_space<vmem>>, %arg10: memref<1x128xf32, #tpu.memory_space<vmem>>, %arg11: memref<1x34x128xbf16, #tpu.memory_space<vmem>>) attributes {dimension_semantics = [#tpu.dimension_semantics<parallel>], iteration_bounds = array<i64: 2>, scalar_prefetch = 0 : i64, scratch_operands = 0 : i64, tpu.core_type = #tpu.core_type<tc>, window_params = [{transform_indices = @transform_0, window_bounds = array<i64: 1, 35, 16>}, {transform_indices = @transform_1, window_bounds = array<i64: 1, 1, 256>}, {pipeline_mode = #tpu.pipeline_mode<synchronous>, transform_indices = @transform_2, window_bounds = array<i64: 16, 256>}, {pipeline_mode = #tpu.pipeline_mode<synchronous>, transform_indices = @transform_3, window_bounds = array<i64: 16, 256>}, {pipeline_mode = #tpu.pipeline_mode<synchronous>, transform_indices = @transform_4, window_bounds = array<i64: 1, 128>}, {pipeline_mode = #tpu.pipeline_mode<synchronous>, transform_indices = @transform_5, window_bounds = array<i64: 1, 128>}, {pipeline_mode = #tpu.pipeline_mode<synchronous>, transform_indices = @transform_6, window_bounds = array<i64: 128, 128>}, {pipeline_mode = #tpu.pipeline_mode<synchronous>, transform_indices = @transform_7, window_bounds = array<i64: 1, 128>}, {pipeline_mode = #tpu.pipeline_mode<synchronous>, transform_indices = @transform_8, window_bounds = array<i64: 128, 128>}, {pipeline_mode = #tpu.pipeline_mode<synchronous>, transform_indices = @transform_9, window_bounds = array<i64: 1, 128>}, {transform_indices = @transform_10, window_bounds = array<i64: 1, 34, 128>}]} {
    %c0 = arith.constant 0 : index
    %c0_0 = arith.constant 0 : index
    %c0_1 = arith.constant 0 : index
    %0 = vector.load %arg1[%c0, %c0_0, %c0_1] : memref<1x35x16xf32, #tpu.memory_space<vmem>>, vector<1x35x16xf32>
    %1 = arith.truncf %0 : vector<1x35x16xf32> to vector<1x35x16xbf16>
    %2 = vector.extract_strided_slice %1 {offsets = [0, 0, 0], sizes = [1, 34, 16], strides = [1, 1, 1]} : vector<1x35x16xbf16> to vector<1x34x16xbf16>
    %3 = vector.shape_cast %2 : vector<1x34x16xbf16> to vector<34x16xbf16>
    %4 = vector.extract_strided_slice %1 {offsets = [0, 1, 0], sizes = [1, 34, 16], strides = [1, 1, 1]} : vector<1x35x16xbf16> to vector<1x34x16xbf16>
    %5 = vector.shape_cast %4 : vector<1x34x16xbf16> to vector<34x16xbf16>
    %c0_2 = arith.constant 0 : index
    %c0_3 = arith.constant 0 : index
    %6 = vector.load %arg3[%c0_2, %c0_3] : memref<16x256xbf16, #tpu.memory_space<vmem>>, vector<16x256xbf16>
    %cst = arith.constant dense<0.000000e+00> : vector<34x256xf32>
    %7 = tpu.matmul %3, %6, %cst {dimension_numbers = #tpu.dot_dimension_numbers<[1], [0], [0], [1], [0, 0, 1, 1], [], []>} : vector<34x16xbf16>, vector<16x256xbf16>, vector<34x256xf32> -> vector<34x256xf32>
    %c0_4 = arith.constant 0 : index
    %c0_5 = arith.constant 0 : index
    %8 = vector.load %arg4[%c0_4, %c0_5] : memref<16x256xbf16, #tpu.memory_space<vmem>>, vector<16x256xbf16>
    %cst_6 = arith.constant dense<0.000000e+00> : vector<34x256xf32>
    %9 = tpu.matmul %5, %8, %cst_6 {dimension_numbers = #tpu.dot_dimension_numbers<[1], [0], [0], [1], [0, 0, 1, 1], [], []>} : vector<34x16xbf16>, vector<16x256xbf16>, vector<34x256xf32> -> vector<34x256xf32>
    %10 = arith.addf %7, %9 : vector<34x256xf32>
    %11 = vector.shape_cast %10 : vector<34x256xf32> to vector<1x34x256xf32>
    %c0_7 = arith.constant 0 : index
    %c0_8 = arith.constant 0 : index
    %c0_9 = arith.constant 0 : index
    %12 = vector.load %arg2[%c0_7, %c0_8, %c0_9] : memref<1x1x256xf32, #tpu.memory_space<vmem>>, vector<1x1x256xf32>
    %13 = vector.broadcast %12 : vector<1x1x256xf32> to vector<1x34x256xf32>
    %14 = arith.addf %11, %13 : vector<1x34x256xf32>
    %cst_10 = arith.constant 0.000000e+00 : f32
    %15 = vector.broadcast %cst_10 : f32 to vector<1x34x256xf32>
    %16 = arith.maximumf %14, %15 : vector<1x34x256xf32>
    %17 = vector.extract_strided_slice %16 {offsets = [0, 0, 0], sizes = [1, 34, 128], strides = [1, 1, 1]} : vector<1x34x256xf32> to vector<1x34x128xf32>
    %18 = vector.extract_strided_slice %16 {offsets = [0, 0, 128], sizes = [1, 34, 128], strides = [1, 1, 1]} : vector<1x34x256xf32> to vector<1x34x128xf32>
    %cst_11 = arith.constant dense<0.000000e+00> : vector<1x34xf32>
    %19 = vector.multi_reduction <add>, %18, %cst_11 [2] : vector<1x34x128xf32> to vector<1x34xf32>
    %20 = vector.shape_cast %19 : vector<1x34xf32> to vector<1x34x1xf32>
    %21 = arith.mulf %18, %18 : vector<1x34x128xf32>
    %cst_12 = arith.constant dense<0.000000e+00> : vector<1x34xf32>
    %22 = vector.multi_reduction <add>, %21, %cst_12 [2] : vector<1x34x128xf32> to vector<1x34xf32>
    %23 = vector.shape_cast %22 : vector<1x34xf32> to vector<1x34x1xf32>
    %cst_13 = arith.constant 3.125000e-02 : f32
    %24 = vector.broadcast %cst_13 : f32 to vector<1x34x1xf32>
    %25 = arith.mulf %20, %24 : vector<1x34x1xf32>
    %26 = arith.mulf %20, %25 : vector<1x34x1xf32>
    %27 = arith.subf %23, %26 : vector<1x34x1xf32>
    %cst_14 = arith.constant 0.0322580636 : f32
    %28 = vector.broadcast %cst_14 : f32 to vector<1x34x1xf32>
    %29 = arith.mulf %27, %28 : vector<1x34x1xf32>
    %cst_15 = arith.constant 0.000000e+00 : f32
    %30 = vector.broadcast %cst_15 : f32 to vector<1x34x1xf32>
    %31 = arith.maximumf %29, %30 : vector<1x34x1xf32>
    %32 = math.sqrt %31 : vector<1x34x1xf32>
    %cst_16 = arith.constant 9.99999997E-7 : f32
    %33 = vector.broadcast %cst_16 : f32 to vector<1x34x1xf32>
    %34 = arith.addf %32, %33 : vector<1x34x1xf32>
    %35 = tpu.reciprocal %34 {approx = true} : vector<1x34x1xf32> -> vector<1x34x1xf32>
    %c0_17 = arith.constant 0 : index
    %c0_18 = arith.constant 0 : index
    %36 = vector.load %arg5[%c0_17, %c0_18] : memref<1x128xf32, #tpu.memory_space<vmem>>, vector<1x128xf32>
    %37 = vector.broadcast %25 : vector<1x34x1xf32> to vector<1x34x128xf32>
    %38 = arith.subf %18, %37 : vector<1x34x128xf32>
    %39 = vector.broadcast %35 : vector<1x34x1xf32> to vector<1x34x128xf32>
    %40 = arith.mulf %38, %39 : vector<1x34x128xf32>
    %41 = vector.shape_cast %36 : vector<1x128xf32> to vector<1x1x128xf32>
    %42 = vector.broadcast %41 : vector<1x1x128xf32> to vector<1x34x128xf32>
    %43 = arith.mulf %42, %40 : vector<1x34x128xf32>
    %c0_19 = arith.constant 0 : index
    %c0_20 = arith.constant 0 : index
    %44 = vector.load %arg6[%c0_19, %c0_20] : memref<1x128xf32, #tpu.memory_space<vmem>>, vector<1x128xf32>
    %45 = vector.shape_cast %44 : vector<1x128xf32> to vector<1x1x128xf32>
    %46 = vector.broadcast %45 : vector<1x1x128xf32> to vector<1x34x128xf32>
    %47 = arith.addf %43, %46 : vector<1x34x128xf32>
    %48 = arith.addf %47, %17 : vector<1x34x128xf32>
    %49 = vector.shape_cast %48 : vector<1x34x128xf32> to vector<34x128xf32>
    %50 = arith.truncf %49 : vector<34x128xf32> to vector<34x128xbf16>
    %c0_21 = arith.constant 0 : index
    %c0_22 = arith.constant 0 : index
    %51 = vector.load %arg7[%c0_21, %c0_22] : memref<128x128xbf16, #tpu.memory_space<vmem>>, vector<128x128xbf16>
    %cst_23 = arith.constant dense<0.000000e+00> : vector<34x128xf32>
    %52 = tpu.matmul %50, %51, %cst_23 {dimension_numbers = #tpu.dot_dimension_numbers<[1], [0], [0], [1], [0, 0, 1, 1], [], []>} : vector<34x128xbf16>, vector<128x128xbf16>, vector<34x128xf32> -> vector<34x128xf32>
    %c0_24 = arith.constant 0 : index
    %c0_25 = arith.constant 0 : index
    %53 = vector.load %arg8[%c0_24, %c0_25] : memref<1x128xf32, #tpu.memory_space<vmem>>, vector<1x128xf32>
    %54 = vector.broadcast %53 : vector<1x128xf32> to vector<34x128xf32>
    %55 = arith.addf %52, %54 : vector<34x128xf32>
    %cst_26 = arith.constant 0.000000e+00 : f32
    %56 = vector.broadcast %cst_26 : f32 to vector<34x128xf32>
    %57 = arith.maximumf %55, %56 : vector<34x128xf32>
    %58 = arith.truncf %57 : vector<34x128xf32> to vector<34x128xbf16>
    %c0_27 = arith.constant 0 : index
    %c0_28 = arith.constant 0 : index
    %59 = vector.load %arg9[%c0_27, %c0_28] : memref<128x128xbf16, #tpu.memory_space<vmem>>, vector<128x128xbf16>
    %cst_29 = arith.constant dense<0.000000e+00> : vector<34x128xf32>
    %60 = tpu.matmul %58, %59, %cst_29 {dimension_numbers = #tpu.dot_dimension_numbers<[1], [0], [0], [1], [0, 0, 1, 1], [], []>} : vector<34x128xbf16>, vector<128x128xbf16>, vector<34x128xf32> -> vector<34x128xf32>
    %c0_30 = arith.constant 0 : index
    %c0_31 = arith.constant 0 : index
    %61 = vector.load %arg10[%c0_30, %c0_31] : memref<1x128xf32, #tpu.memory_space<vmem>>, vector<1x128xf32>
    %62 = vector.broadcast %61 : vector<1x128xf32> to vector<34x128xf32>
    %63 = arith.addf %60, %62 : vector<34x128xf32>
    %64 = vector.shape_cast %63 : vector<34x128xf32> to vector<1x34x128xf32>
    %65 = arith.addf %64, %48 : vector<1x34x128xf32>
    %66 = arith.truncf %65 : vector<1x34x128xf32> to vector<1x34x128xbf16>
    %c0_32 = arith.constant 0 : index
    %c0_33 = arith.constant 0 : index
    %c0_34 = arith.constant 0 : index
    %67 = vector.load %arg11[%c0_32, %c0_33, %c0_34] : memref<1x34x128xbf16, #tpu.memory_space<vmem>>, vector<1x34x128xbf16>
    tpu.vector_store %arg11[%c0_32, %c0_33, %c0_34], %66 {strides = array<i32>} : memref<1x34x128xbf16, #tpu.memory_space<vmem>>, vector<1x34x128xbf16>,
    return
  }
  func.func @transform_0(%arg0: i32) -> (i32, i32, i32) {
    %c0_i32 = arith.constant 0 : i32
    %c0_i32_0 = arith.constant 0 : i32
    %c0_i32_1 = arith.constant 0 : i32
    return %arg0, %c0_i32, %c0_i32_0 : i32, i32, i32
  }
  func.func @transform_1(%arg0: i32) -> (i32, i32, i32) {
    %c0_i32 = arith.constant 0 : i32
    %c0_i32_0 = arith.constant 0 : i32
    %c0_i32_1 = arith.constant 0 : i32
    return %arg0, %c0_i32, %c0_i32_0 : i32, i32, i32
  }
  func.func @transform_2(%arg0: i32) -> (i32, i32) {
    %c0_i32 = arith.constant 0 : i32
    %c0_i32_0 = arith.constant 0 : i32
    %c0_i32_1 = arith.constant 0 : i32
    return %c0_i32, %c0_i32_0 : i32, i32
  }
  func.func @transform_3(%arg0: i32) -> (i32, i32) {
    %c0_i32 = arith.constant 0 : i32
    %c0_i32_0 = arith.constant 0 : i32
    %c0_i32_1 = arith.constant 0 : i32
    return %c0_i32, %c0_i32_0 : i32, i32
  }
  func.func @transform_4(%arg0: i32) -> (i32, i32) {
    %c0_i32 = arith.constant 0 : i32
    %c0_i32_0 = arith.constant 0 : i32
    %c0_i32_1 = arith.constant 0 : i32
    return %c0_i32, %c0_i32_0 : i32, i32
  }
  func.func @transform_5(%arg0: i32) -> (i32, i32) {
    %c0_i32 = arith.constant 0 : i32
    %c0_i32_0 = arith.constant 0 : i32
    %c0_i32_1 = arith.constant 0 : i32
    return %c0_i32, %c0_i32_0 : i32, i32
  }
  func.func @transform_6(%arg0: i32) -> (i32, i32) {
    %c0_i32 = arith.constant 0 : i32
    %c0_i32_0 = arith.constant 0 : i32
    %c0_i32_1 = arith.constant 0 : i32
    return %c0_i32, %c0_i32_0 : i32, i32
  }
  func.func @transform_7(%arg0: i32) -> (i32, i32) {
    %c0_i32 = arith.constant 0 : i32
    %c0_i32_0 = arith.constant 0 : i32
    %c0_i32_1 = arith.constant 0 : i32
    return %c0_i32, %c0_i32_0 : i32, i32
  }
  func.func @transform_8(%arg0: i32) -> (i32, i32) {
    %c0_i32 = arith.constant 0 : i32
    %c0_i32_0 = arith.constant 0 : i32
    %c0_i32_1 = arith.constant 0 : i32
    return %c0_i32, %c0_i32_0 : i32, i32
  }
  func.func @transform_9(%arg0: i32) -> (i32, i32) {
    %c0_i32 = arith.constant 0 : i32
    %c0_i32_0 = arith.constant 0 : i32
    %c0_i32_1 = arith.constant 0 : i32
    return %c0_i32, %c0_i32_0 : i32, i32
  }
  func.func @transform_10(%arg0: i32) -> (i32, i32, i32) {
    %c0_i32 = arith.constant 0 : i32
    %c0_i32_0 = arith.constant 0 : i32
    %c0_i32_1 = arith.constant 0 : i32
    return %arg0, %c0_i32, %c0_i32_0 : i32, i32, i32
  }
}

module attributes {stable_mosaic.version = 11 : i64} {
  func.func @rela_kernel(%arg0: i32, %arg1: memref<1x35x16xf32, #tpu.memory_space<vmem>>, %arg2: memref<1x1x256xf32, #tpu.memory_space<vmem>>, %arg3: memref<16x256xbf16, #tpu.memory_space<vmem>>, %arg4: memref<16x256xbf16, #tpu.memory_space<vmem>>, %arg5: memref<1x128xf32, #tpu.memory_space<vmem>>, %arg6: memref<1x128xf32, #tpu.memory_space<vmem>>, %arg7: memref<128x128xbf16, #tpu.memory_space<vmem>>, %arg8: memref<1x128xf32, #tpu.memory_space<vmem>>, %arg9: memref<128x128xbf16, #tpu.memory_space<vmem>>, %arg10: memref<1x128xf32, #tpu.memory_space<vmem>>, %arg11: memref<1x34x128xbf16, #tpu.memory_space<vmem>>) attributes {dimension_semantics = [#tpu.dimension_semantics<parallel>], iteration_bounds = array<i64: 2>, scalar_prefetch = 0 : i64, scratch_operands = 0 : i64, tpu.core_type = #tpu.core_type<tc>, window_params = [{transform_indices = @transform_0, window_bounds = array<i64: 1, 35, 16>}, {transform_indices = @transform_1, window_bounds = array<i64: 1, 1, 256>}, {pipeline_mode = #tpu.pipeline_mode<synchronous>, transform_indices = @transform_2, window_bounds = array<i64: 16, 256>}, {pipeline_mode = #tpu.pipeline_mode<synchronous>, transform_indices = @transform_3, window_bounds = array<i64: 16, 256>}, {pipeline_mode = #tpu.pipeline_mode<synchronous>, transform_indices = @transform_4, window_bounds = array<i64: 1, 128>}, {pipeline_mode = #tpu.pipeline_mode<synchronous>, transform_indices = @transform_5, window_bounds = array<i64: 1, 128>}, {pipeline_mode = #tpu.pipeline_mode<synchronous>, transform_indices = @transform_6, window_bounds = array<i64: 128, 128>}, {pipeline_mode = #tpu.pipeline_mode<synchronous>, transform_indices = @transform_7, window_bounds = array<i64: 1, 128>}, {pipeline_mode = #tpu.pipeline_mode<synchronous>, transform_indices = @transform_8, window_bounds = array<i64: 128, 128>}, {pipeline_mode = #tpu.pipeline_mode<synchronous>, transform_indices = @transform_9, window_bounds = array<i64: 1, 128>}, {transform_indices = @transform_10, window_bounds = array<i64: 1, 34, 128>}]} {
    %c0 = arith.constant 0 : index
    %c0_0 = arith.constant 0 : index
    %c0_1 = arith.constant 0 : index
    %0 = vector.load %arg1[%c0, %c0_0, %c0_1] : memref<1x35x16xf32, #tpu.memory_space<vmem>>, vector<1x35x16xf32>
    %1 = arith.truncf %0 : vector<1x35x16xf32> to vector<1x35x16xbf16>
    %2 = vector.extract_strided_slice %1 {offsets = [0, 0, 0], sizes = [1, 34, 16], strides = [1, 1, 1]} : vector<1x35x16xbf16> to vector<1x34x16xbf16>
    %3 = vector.shape_cast %2 : vector<1x34x16xbf16> to vector<34x16xbf16>
    %4 = vector.extract_strided_slice %1 {offsets = [0, 1, 0], sizes = [1, 34, 16], strides = [1, 1, 1]} : vector<1x35x16xbf16> to vector<1x34x16xbf16>
    %5 = vector.shape_cast %4 : vector<1x34x16xbf16> to vector<34x16xbf16>
    %c0_2 = arith.constant 0 : index
    %c0_3 = arith.constant 0 : index
    %6 = vector.load %arg3[%c0_2, %c0_3] : memref<16x256xbf16, #tpu.memory_space<vmem>>, vector<16x256xbf16>
    %cst = arith.constant dense<0.000000e+00> : vector<34x256xf32>
    %7 = tpu.matmul %3, %6, %cst {dimension_numbers = #tpu.dot_dimension_numbers<[1], [0], [0], [1], [0, 0, 1, 1], [], []>} : vector<34x16xbf16>, vector<16x256xbf16>, vector<34x256xf32> -> vector<34x256xf32>
    %c0_4 = arith.constant 0 : index
    %c0_5 = arith.constant 0 : index
    %8 = vector.load %arg4[%c0_4, %c0_5] : memref<16x256xbf16, #tpu.memory_space<vmem>>, vector<16x256xbf16>
    %cst_6 = arith.constant dense<0.000000e+00> : vector<34x256xf32>
    %9 = tpu.matmul %5, %8, %cst_6 {dimension_numbers = #tpu.dot_dimension_numbers<[1], [0], [0], [1], [0, 0, 1, 1], [], []>} : vector<34x16xbf16>, vector<16x256xbf16>, vector<34x256xf32> -> vector<34x256xf32>
    %10 = arith.addf %7, %9 : vector<34x256xf32>
    %11 = vector.shape_cast %10 : vector<34x256xf32> to vector<1x34x256xf32>
    %c0_7 = arith.constant 0 : index
    %c0_8 = arith.constant 0 : index
    %c0_9 = arith.constant 0 : index
    %12 = vector.load %arg2[%c0_7, %c0_8, %c0_9] : memref<1x1x256xf32, #tpu.memory_space<vmem>>, vector<1x1x256xf32>
    %13 = vector.broadcast %12 : vector<1x1x256xf32> to vector<1x34x256xf32>
    %14 = arith.addf %11, %13 : vector<1x34x256xf32>
    %cst_10 = arith.constant 0.000000e+00 : f32
    %15 = vector.broadcast %cst_10 : f32 to vector<1x34x256xf32>
    %16 = arith.maximumf %14, %15 : vector<1x34x256xf32>
    %17 = vector.extract_strided_slice %16 {offsets = [0, 0, 0], sizes = [1, 34, 128], strides = [1, 1, 1]} : vector<1x34x256xf32> to vector<1x34x128xf32>
    %18 = vector.extract_strided_slice %16 {offsets = [0, 0, 128], sizes = [1, 34, 128], strides = [1, 1, 1]} : vector<1x34x256xf32> to vector<1x34x128xf32>
    %cst_11 = arith.constant dense<0.000000e+00> : vector<1x34xf32>
    %19 = vector.multi_reduction <add>, %18, %cst_11 [2] : vector<1x34x128xf32> to vector<1x34xf32>
    %20 = vector.shape_cast %19 : vector<1x34xf32> to vector<1x34x1xf32>
    %21 = arith.mulf %18, %18 : vector<1x34x128xf32>
    %cst_12 = arith.constant dense<0.000000e+00> : vector<1x34xf32>
    %22 = vector.multi_reduction <add>, %21, %cst_12 [2] : vector<1x34x128xf32> to vector<1x34xf32>
    %23 = vector.shape_cast %22 : vector<1x34xf32> to vector<1x34x1xf32>
    %cst_13 = arith.constant 3.125000e-02 : f32
    %24 = vector.broadcast %cst_13 : f32 to vector<1x34x1xf32>
    %25 = arith.mulf %20, %24 : vector<1x34x1xf32>
    %26 = arith.mulf %20, %25 : vector<1x34x1xf32>
    %27 = arith.subf %23, %26 : vector<1x34x1xf32>
    %cst_14 = arith.constant 0.0322580636 : f32
    %28 = vector.broadcast %cst_14 : f32 to vector<1x34x1xf32>
    %29 = arith.mulf %27, %28 : vector<1x34x1xf32>
    %cst_15 = arith.constant 0.000000e+00 : f32
    %30 = vector.broadcast %cst_15 : f32 to vector<1x34x1xf32>
    %31 = arith.maximumf %29, %30 : vector<1x34x1xf32>
    %32 = math.sqrt %31 : vector<1x34x1xf32>
    %cst_16 = arith.constant 9.99999997E-7 : f32
    %33 = vector.broadcast %cst_16 : f32 to vector<1x34x1xf32>
    %34 = arith.addf %32, %33 : vector<1x34x1xf32>
    %35 = tpu.reciprocal %34 {approx = true} : vector<1x34x1xf32> -> vector<1x34x1xf32>
    %c0_17 = arith.constant 0 : index
    %c0_18 = arith.constant 0 : index
    %36 = vector.load %arg5[%c0_17, %c0_18] : memref<1x128xf32, #tpu.memory_space<vmem>>, vector<1x128xf32>
    %37 = vector.broadcast %25 : vector<1x34x1xf32> to vector<1x34x128xf32>
    %38 = arith.subf %18, %37 : vector<1x34x128xf32>
    %39 = vector.broadcast %35 : vector<1x34x1xf32> to vector<1x34x128xf32>
    %40 = arith.mulf %38, %39 : vector<1x34x128xf32>
    %41 = vector.shape_cast %36 : vector<1x128xf32> to vector<1x1x128xf32>
    %42 = vector.broadcast %41 : vector<1x1x128xf32> to vector<1x34x128xf32>
    %43 = arith.mulf %42, %40 : vector<1x34x128xf32>
    %c0_19 = arith.constant 0 : index
    %c0_20 = arith.constant 0 : index
    %44 = vector.load %arg6[%c0_19, %c0_20] : memref<1x128xf32, #tpu.memory_space<vmem>>, vector<1x128xf32>
    %45 = vector.shape_cast %44 : vector<1x128xf32> to vector<1x1x128xf32>
    %46 = vector.broadcast %45 : vector<1x1x128xf32> to vector<1x34x128xf32>
    %47 = arith.addf %43, %46 : vector<1x34x128xf32>
    %48 = arith.addf %47, %17 : vector<1x34x128xf32>
    %49 = vector.shape_cast %48 : vector<1x34x128xf32> to vector<34x128xf32>
    %50 = arith.truncf %49 : vector<34x128xf32> to vector<34x128xbf16>
    %c0_21 = arith.constant 0 : index
    %c0_22 = arith.constant 0 : index
    %51 = vector.load %arg7[%c0_21, %c0_22] : memref<128x128xbf16, #tpu.memory_space<vmem>>, vector<128x128xbf16>
    %cst_23 = arith.constant dense<0.000000e+00> : vector<34x128xf32>
    %52 = tpu.matmul %50, %51, %cst_23 {dimension_numbers = #tpu.dot_dimension_numbers<[1], [0], [0], [1], [0, 0, 1, 1], [], []>} : vector<34x128xbf16>, vector<128x128xbf16>, vector<34x128xf32> -> vector<34x128xf32>
    %c0_24 = arith.constant 0 : index
    %c0_25 = arith.constant 0 : index
    %53 = vector.load %arg8[%c0_24, %c0_25] : memref<1x128xf32, #tpu.memory_space<vmem>>, vector<1x128xf32>
    %54 = vector.broadcast %53 : vector<1x128xf32> to vector<34x128xf32>
    %55 = arith.addf %52, %54 : vector<34x128xf32>
    %cst_26 = arith.constant 0.000000e+00 : f32
    %56 = vector.broadcast %cst_26 : f32 to vector<34x128xf32>
    %57 = arith.maximumf %55, %56 : vector<34x128xf32>
    %58 = arith.truncf %57 : vector<34x128xf32> to vector<34x128xbf16>
    %c0_27 = arith.constant 0 : index
    %c0_28 = arith.constant 0 : index
    %59 = vector.load %arg9[%c0_27, %c0_28] : memref<128x128xbf16, #tpu.memory_space<vmem>>, vector<128x128xbf16>
    %cst_29 = arith.constant dense<0.000000e+00> : vector<34x128xf32>
    %60 = tpu.matmul %58, %59, %cst_29 {dimension_numbers = #tpu.dot_dimension_numbers<[1], [0], [0], [1], [0, 0, 1, 1], [], []>} : vector<34x128xbf16>, vector<128x128xbf16>, vector<34x128xf32> -> vector<34x128xf32>
    %c0_30 = arith.constant 0 : index
    %c0_31 = arith.constant 0 : index
    %61 = vector.load %arg10[%c0_30, %c0_31] : memref<1x128xf32, #tpu.memory_space<vmem>>, vector<1x128xf32>
    %62 = vector.broadcast %61 : vector<1x128xf32> to vector<34x128xf32>
    %63 = arith.addf %60, %62 : vector<34x128xf32>
    %64 = vector.shape_cast %63 : vector<34x128xf32> to vector<1x34x128xf32>
    %65 = arith.addf %64, %48 : vector<1x34x128xf32>
    %66 = arith.truncf %65 : vector<1x34x128xf32> to vector<1x34x128xbf16>
    %c0_32 = arith.constant 0 : index
    %c0_33 = arith.constant 0 : index
    %c0_34 = arith.constant 0 : index
    %67 = vector.load %arg11[%c0_32, %c0_33, %c0_34] : memref<1x34x128xbf16, #tpu.memory_space<vmem>>, vector<1x34x128xbf16>
    tpu.vector_store %arg11[%c0_32, %c0_33, %c0_34], %66 {strides = array<i32>} : memref<1x34x128xbf16, #tpu.memory_space<vmem>>, vector<1x34x128xbf16>,
    return
  }
  func.func @transform_0(%arg0: i32) -> (i32, i32, i32) {
    %c0_i32 = arith.constant 0 : i32
    %c0_i32_0 = arith.constant 0 : i32
    %c0_i32_1 = arith.constant 0 : i32
    return %arg0, %c0_i32, %c0_i32_0 : i32, i32, i32
  }
  func.func @transform_1(%arg0: i32) -> (i32, i32, i32) {
    %c0_i32 = arith.constant 0 : i32
    %c0_i32_0 = arith.constant 0 : i32
    %c0_i32_1 = arith.constant 0 : i32
    return %arg0, %c0_i32, %c0_i32_0 : i32, i32, i32
  }
  func.func @transform_2(%arg0: i32) -> (i32, i32) {
    %c0_i32 = arith.constant 0 : i32
    %c0_i32_0 = arith.constant 0 : i32
    %c0_i32_1 = arith.constant 0 : i32
    return %c0_i32, %c0_i32_0 : i32, i32
  }
  func.func @transform_3(%arg0: i32) -> (i32, i32) {
    %c0_i32 = arith.constant 0 : i32
    %c0_i32_0 = arith.constant 0 : i32
    %c0_i32_1 = arith.constant 0 : i32
    return %c0_i32, %c0_i32_0 : i32, i32
  }
  func.func @transform_4(%arg0: i32) -> (i32, i32) {
    %c0_i32 = arith.constant 0 : i32
    %c0_i32_0 = arith.constant 0 : i32
    %c0_i32_1 = arith.constant 0 : i32
    return %c0_i32, %c0_i32_0 : i32, i32
  }
  func.func @transform_5(%arg0: i32) -> (i32, i32) {
    %c0_i32 = arith.constant 0 : i32
    %c0_i32_0 = arith.constant 0 : i32
    %c0_i32_1 = arith.constant 0 : i32
    return %c0_i32, %c0_i32_0 : i32, i32
  }
  func.func @transform_6(%arg0: i32) -> (i32, i32) {
    %c0_i32 = arith.constant 0 : i32
    %c0_i32_0 = arith.constant 0 : i32
    %c0_i32_1 = arith.constant 0 : i32
    return %c0_i32, %c0_i32_0 : i32, i32
  }
  func.func @transform_7(%arg0: i32) -> (i32, i32) {
    %c0_i32 = arith.constant 0 : i32
    %c0_i32_0 = arith.constant 0 : i32
    %c0_i32_1 = arith.constant 0 : i32
    return %c0_i32, %c0_i32_0 : i32, i32
  }
  func.func @transform_8(%arg0: i32) -> (i32, i32) {
    %c0_i32 = arith.constant 0 : i32
    %c0_i32_0 = arith.constant 0 : i32
    %c0_i32_1 = arith.constant 0 : i32
    return %c0_i32, %c0_i32_0 : i32, i32
  }
  func.func @transform_9(%arg0: i32) -> (i32, i32) {
    %c0_i32 = arith.constant 0 : i32
    %c0_i32_0 = arith.constant 0 : i32
    %c0_i32_1 = arith.constant 0 : i32
    return %c0_i32, %c0_i32_0 : i32, i32
  }
  func.func @transform_10(%arg0: i32) -> (i32, i32, i32) {
    %c0_i32 = arith.constant 0 : i32
    %c0_i32_0 = arith.constant 0 : i32
    %c0_i32_1 = arith.constant 0 : i32
    return %arg0, %c0_i32, %c0_i32_0 : i32, i32, i32
  }
}

</mosaic_0001>

<llo_original>
// kernel: tpu_custom_call.1
$region0: #{tpu_custom_call.1}
  #allocation0 [shape = 'u32[]', space=smem, size = 0x4, offset = 0x4, fixed_abs, tag = 'smem constant byte address 0x4 - core index']
  #allocation1 [shape = 'u32[72,128]{1,0:T(1,128)}', space=vmem, size = 0x9000, scoped, tag = 'internal scratch']
  %s0 = inlined_call_operand.vmem [shape: f32[2,35,16], index: 0, kind: input, shape index: {}]
  %s1 = inlined_call_operand.vmem [shape: f32[2,1,256], index: 1, kind: input, shape index: {}]
  %s2 = inlined_call_operand.vmem [shape: bf16[16,256], index: 2, kind: input, shape index: {}]
  %s3 = inlined_call_operand.vmem [shape: bf16[16,256], index: 3, kind: input, shape index: {}]
  %s4 = inlined_call_operand.vmem [shape: f32[1,128], index: 4, kind: input, shape index: {}]
  %s5 = inlined_call_operand.vmem [shape: f32[1,128], index: 5, kind: input, shape index: {}]
  %s6 = inlined_call_operand.vmem [shape: bf16[128,128], index: 6, kind: input, shape index: {}]
  %s7 = inlined_call_operand.vmem [shape: f32[1,128], index: 7, kind: input, shape index: {}]
  %s8 = inlined_call_operand.hbm [shape: bf16[128,128], index: 8, kind: input, shape index: {}]
  %s9 = inlined_call_operand.vmem [shape: f32[1,128], index: 9, kind: input, shape index: {}]
  %s10 = inlined_call_operand.vmem [shape: bf16[2,34,128], index: 10, kind: output, shape index: {}]
  %s11 = sld [smem:[#allocation0]]
  $region77: #{tpu_custom_call.1} parent=0
    _
  %s13 = ssub.s32 1, %s11
  %s14 = scalar_select 0, %s13, %s11
  $region1: #{tpu_custom_call.1} parent=0
    #allocation2 [shape = 'u8[32768]{0}', space=vmem, size = 0x8000, scoped, tag = 'input window, operand 8, single buffered']
    #allocation3 [shape = 's32[2]{0}', space=sflag, size = 0x8, scoped, tag = 'scoped memory for tpu_custom_call.1']
    %15 = vsyncpa [#allocation3], 0
    loop: start=0, step=1, limit=4
    $region2: #{tpu_custom_call.1} parent=1 // loop_pre_header
      _
    $region3: #{tpu_custom_call.1} parent=1 // loop_header
      %s17 = sphi 0, %s21
      %p18 = scmp.ge.s32.totalorder %s17, 4
      %s27 = sphi 0, %s29
      %s30 = sphi 0, %s27
      %s31 = sphi 0, %s30
      %s47 = sphi 0, %s31
      %s53 = sphi 0, %s55
      %s56 = sphi 0, %s53
      %s57 = sphi 0, %s56
      %s73 = sphi 0, %s57
      %s77 = sphi 0, %s77
      %s79 = sphi 0, %s77
      %s80 = sphi 0, %s79
      %s94 = sphi 0, %s80
      %s98 = sphi 0, %s98
      %s100 = sphi 0, %s98
      %s101 = sphi 0, %s100
      %s115 = sphi 0, %s101
      %s119 = sphi 0, %s119
      %s121 = sphi 0, %s119
      %s122 = sphi 0, %s121
      %s136 = sphi 0, %s122
      %s140 = sphi 0, %s140
      %s142 = sphi 0, %s140
      %s143 = sphi 0, %s142
      %s157 = sphi 0, %s143
      %s161 = sphi 0, %s161
      %s163 = sphi 0, %s161
      %s164 = sphi 0, %s163
      %s178 = sphi 0, %s164
      %s182 = sphi 0, %s182
      %s184 = sphi 0, %s182
      %s185 = sphi 0, %s184
      %s199 = sphi 0, %s185
      %s203 = sphi 0, %s203
      %s205 = sphi 0, %s203
      %s206 = sphi 0, %s205
      %s220 = sphi 0, %s206
      %s224 = sphi 0, %s224
      %s226 = sphi 0, %s224
      %s227 = sphi 0, %s226
      %s241 = sphi 0, %s227
      %s247 = sphi 0, %s249
      %s250 = sphi 0, %s247
      %s251 = sphi 0, %s250
      %s267 = sphi 0, %s251
    $region4: #{tpu_custom_call.1} parent=1 // loop_header_branch
      %20 = sbr.rel (%p18) target = $region8
    $region5: #{tpu_custom_call.1} parent=1 // loop_body
      %s22 = ssub.s32 %s17, 1
      %s23 = ssub.s32 %s17, 2
      %s24 = sadd.s32 %s17, 1
      %s25 = ssub.s32 %s17, %s24
      %p26 = scmp.eq.s32.totalorder %s25, 0
      %s28 = sadd.s32 %s27, 1
      %s29 = scalar_select %p26, %s27, %s28
      %p32 = pneg %p26
      %p33 = scmp.eq.s32.totalorder %s17, 1
      %p34 = por %p32, %p33
      %p35 = scmp.ne.s32.totalorder %s27, %s30
      %p36 = scmp.eq.s32.totalorder %s17, 0
      %p37 = por %p35, %p36
      %p38 = scmp.ne.s32.totalorder %s27, %s30
      %p39 = scmp.eq.s32.totalorder %s22, 1
      %p40 = por %p38, %p39
      %p41 = scmp.ne.s32.totalorder %s30, %s31
      %p42 = scmp.eq.s32.totalorder %s22, 0
      %p43 = por %p41, %p42
      %p44 = scmp.ne.s32.totalorder %s30, %s31
      %p45 = scmp.eq.s32.totalorder %s23, 1
      %p46 = por %p44, %p45
      %p48 = scmp.ne.s32.totalorder %s31, %s47
      %p49 = scmp.eq.s32.totalorder %s23, 0
      %p50 = por %p48, %p49
      %s51 = ssub.s32 %s17, %s24
      %p52 = scmp.eq.s32.totalorder %s51, 0
      %s54 = sadd.s32 %s53, 1
      %s55 = scalar_select %p52, %s53, %s54
      %p58 = pneg %p52
      %p59 = scmp.eq.s32.totalorder %s17, 1
      %p60 = por %p58, %p59
      %p61 = scmp.ne.s32.totalorder %s53, %s56
      %p62 = scmp.eq.s32.totalorder %s17, 0
      %p63 = por %p61, %p62
      %p64 = scmp.ne.s32.totalorder %s53, %s56
      %p65 = scmp.eq.s32.totalorder %s22, 1
      %p66 = por %p64, %p65
      %p67 = scmp.ne.s32.totalorder %s56, %s57
      %p68 = scmp.eq.s32.totalorder %s22, 0
      %p69 = por %p67, %p68
      %p70 = scmp.ne.s32.totalorder %s56, %s57
      %p71 = scmp.eq.s32.totalorder %s23, 1
      %p72 = por %p70, %p71
      %p74 = scmp.ne.s32.totalorder %s57, %s73
      %p75 = scmp.eq.s32.totalorder %s23, 0
      %p76 = por %p74, %p75
      %s78 = sadd.s32 %s77, 1
      %p81 = scmp.eq.s32.totalorder %s17, 1
      %p82 = scmp.ne.s32.totalorder %s77, %s79
      %p83 = scmp.eq.s32.totalorder %s17, 0
      %p84 = por %p82, %p83
      %p85 = scmp.ne.s32.totalorder %s77, %s79
      %p86 = scmp.eq.s32.totalorder %s22, 1
      %p87 = por %p85, %p86
      %p88 = scmp.ne.s32.totalorder %s79, %s80
      %p89 = scmp.eq.s32.totalorder %s22, 0
      %p90 = por %p88, %p89
      %p91 = scmp.ne.s32.totalorder %s79, %s80
      %p92 = scmp.eq.s32.totalorder %s23, 1
      %p93 = por %p91, %p92
      %p95 = scmp.ne.s32.totalorder %s80, %s94
      %p96 = scmp.eq.s32.totalorder %s23, 0
      %p97 = por %p95, %p96
      %s99 = sadd.s32 %s98, 1
      %p102 = scmp.eq.s32.totalorder %s17, 1
      %p103 = scmp.ne.s32.totalorder %s98, %s100
      %p104 = scmp.eq.s32.totalorder %s17, 0
      %p105 = por %p103, %p104
      %p106 = scmp.ne.s32.totalorder %s98, %s100
      %p107 = scmp.eq.s32.totalorder %s22, 1
      %p108 = por %p106, %p107
      %p109 = scmp.ne.s32.totalorder %s100, %s101
      %p110 = scmp.eq.s32.totalorder %s22, 0
      %p111 = por %p109, %p110
      %p112 = scmp.ne.s32.totalorder %s100, %s101
      %p113 = scmp.eq.s32.totalorder %s23, 1
      %p114 = por %p112, %p113
      %p116 = scmp.ne.s32.totalorder %s101, %s115
      %p117 = scmp.eq.s32.totalorder %s23, 0
      %p118 = por %p116, %p117
      %s120 = sadd.s32 %s119, 1
      %p123 = scmp.eq.s32.totalorder %s17, 1
      %p124 = scmp.ne.s32.totalorder %s119, %s121
      %p125 = scmp.eq.s32.totalorder %s17, 0
      %p126 = por %p124, %p125
      %p127 = scmp.ne.s32.totalorder %s119, %s121
      %p128 = scmp.eq.s32.totalorder %s22, 1
      %p129 = por %p127, %p128
      %p130 = scmp.ne.s32.totalorder %s121, %s122
      %p131 = scmp.eq.s32.totalorder %s22, 0
      %p132 = por %p130, %p131
      %p133 = scmp.ne.s32.totalorder %s121, %s122
      %p134 = scmp.eq.s32.totalorder %s23, 1
      %p135 = por %p133, %p134
      %p137 = scmp.ne.s32.totalorder %s122, %s136
      %p138 = scmp.eq.s32.totalorder %s23, 0
      %p139 = por %p137, %p138
      %s141 = sadd.s32 %s140, 1
      %p144 = scmp.eq.s32.totalorder %s17, 1
      %p145 = scmp.ne.s32.totalorder %s140, %s142
      %p146 = scmp.eq.s32.totalorder %s17, 0
      %p147 = por %p145, %p146
      %p148 = scmp.ne.s32.totalorder %s140, %s142
      %p149 = scmp.eq.s32.totalorder %s22, 1
      %p150 = por %p148, %p149
      %p151 = scmp.ne.s32.totalorder %s142, %s143
      %p152 = scmp.eq.s32.totalorder %s22, 0
      %p153 = por %p151, %p152
      %p154 = scmp.ne.s32.totalorder %s142, %s143
      %p155 = scmp.eq.s32.totalorder %s23, 1
      %p156 = por %p154, %p155
      %p158 = scmp.ne.s32.totalorder %s143, %s157
      %p159 = scmp.eq.s32.totalorder %s23, 0
      %p160 = por %p158, %p159
      %s162 = sadd.s32 %s161, 1
      %p165 = scmp.eq.s32.totalorder %s17, 1
      %p166 = scmp.ne.s32.totalorder %s161, %s163
      %p167 = scmp.eq.s32.totalorder %s17, 0
      %p168 = por %p166, %p167
      %p169 = scmp.ne.s32.totalorder %s161, %s163
      %p170 = scmp.eq.s32.totalorder %s22, 1
      %p171 = por %p169, %p170
      %p172 = scmp.ne.s32.totalorder %s163, %s164
      %p173 = scmp.eq.s32.totalorder %s22, 0
      %p174 = por %p172, %p173
      %p175 = scmp.ne.s32.totalorder %s163, %s164
      %p176 = scmp.eq.s32.totalorder %s23, 1
      %p177 = por %p175, %p176
      %p179 = scmp.ne.s32.totalorder %s164, %s178
      %p180 = scmp.eq.s32.totalorder %s23, 0
      %p181 = por %p179, %p180
      %s183 = sadd.s32 %s182, 1
      %p186 = scmp.eq.s32.totalorder %s17, 1
      %p187 = scmp.ne.s32.totalorder %s182, %s184
      %p188 = scmp.eq.s32.totalorder %s17, 0
      %p189 = por %p187, %p188
      %p190 = scmp.ne.s32.totalorder %s182, %s184
      %p191 = scmp.eq.s32.totalorder %s22, 1
      %p192 = por %p190, %p191
      %p193 = scmp.ne.s32.totalorder %s184, %s185
      %p194 = scmp.eq.s32.totalorder %s22, 0
      %p195 = por %p193, %p194
      %p196 = scmp.ne.s32.totalorder %s184, %s185
      %p197 = scmp.eq.s32.totalorder %s23, 1
      %p198 = por %p196, %p197
      %p200 = scmp.ne.s32.totalorder %s185, %s199
      %p201 = scmp.eq.s32.totalorder %s23, 0
      %p202 = por %p200, %p201
      %s204 = sadd.s32 %s203, 1
      %p207 = scmp.eq.s32.totalorder %s17, 1
      %p208 = scmp.ne.s32.totalorder %s203, %s205
      %p209 = scmp.eq.s32.totalorder %s17, 0
      %p210 = por %p208, %p209
      %p211 = scmp.ne.s32.totalorder %s203, %s205
      %p212 = scmp.eq.s32.totalorder %s22, 1
      %p213 = por %p211, %p212
      %p214 = scmp.ne.s32.totalorder %s205, %s206
      %p215 = scmp.eq.s32.totalorder %s22, 0
      %p216 = por %p214, %p215
      %p217 = scmp.ne.s32.totalorder %s205, %s206
      %p218 = scmp.eq.s32.totalorder %s23, 1
      %p219 = por %p217, %p218
      %p221 = scmp.ne.s32.totalorder %s206, %s220
      %p222 = scmp.eq.s32.totalorder %s23, 0
      %p223 = por %p221, %p222
      %s225 = sadd.s32 %s224, 1
      %p228 = scmp.eq.s32.totalorder %s17, 1
      %p229 = scmp.ne.s32.totalorder %s224, %s226
      %p230 = scmp.eq.s32.totalorder %s17, 0
      %p231 = por %p229, %p230
      %p232 = scmp.ne.s32.totalorder %s224, %s226
      %p233 = scmp.eq.s32.totalorder %s22, 1
      %p234 = por %p232, %p233
      %p235 = scmp.ne.s32.totalorder %s226, %s227
      %p236 = scmp.eq.s32.totalorder %s22, 0
      %p237 = por %p235, %p236
      %p238 = scmp.ne.s32.totalorder %s226, %s227
      %p239 = scmp.eq.s32.totalorder %s23, 1
      %p240 = por %p238, %p239
      %p242 = scmp.ne.s32.totalorder %s227, %s241
      %p243 = scmp.eq.s32.totalorder %s23, 0
      %p244 = por %p242, %p243
      %s245 = ssub.s32 %s17, %s24
      %p246 = scmp.eq.s32.totalorder %s245, 0
      %s248 = sadd.s32 %s247, 1
      %s249 = scalar_select %p246, %s247, %s248
      %p252 = pneg %p246
      %p253 = scmp.eq.s32.totalorder %s17, 1
      %p254 = por %p252, %p253
      %p255 = scmp.ne.s32.totalorder %s247, %s250
      %p256 = scmp.eq.s32.totalorder %s17, 0
      %p257 = por %p255, %p256
      %p258 = scmp.ne.s32.totalorder %s247, %s250
      %p259 = scmp.eq.s32.totalorder %s22, 1
      %p260 = por %p258, %p259
      %p261 = scmp.ne.s32.totalorder %s250, %s251
      %p262 = scmp.eq.s32.totalorder %s22, 0
      %p263 = por %p261, %p262
      %p264 = scmp.ne.s32.totalorder %s250, %s251
      %p265 = scmp.eq.s32.totalorder %s23, 1
      %p266 = por %p264, %p265
      %p268 = scmp.ne.s32.totalorder %s251, %s267
      %p269 = scmp.eq.s32.totalorder %s23, 0
      %p270 = por %p268, %p269
      %p271 = scmp.le.s32.totalorder 1, %s17
      %p272 = scmp.lt.s32.totalorder %s17, 3
      %p273 = pnand %p271, %p272
      %p274 = pneg %p273
      // Predicated region
      $region9: #{tpu_custom_call.1} parent=5 // pred_check
        _
      $region10: #{tpu_custom_call.1} parent=5 // pred_check_branch
        %276 = sbr.rel (%p273) target = $region12
      $region11: #{tpu_custom_call.1} parent=5 // pred_region
        %s277 = ssub.s32 %s17, 1
        // Predicated region
        $region13: #{tpu_custom_call.1} parent=11 // pred_check
          %p278 = pneg %p90
        $region14: #{tpu_custom_call.1} parent=11 // pred_check_branch
          %280 = sbr.rel (%p278) target = $region16
        $region15: #{tpu_custom_call.1} parent=11 // pred_region
          _
        $region16: #{tpu_custom_call.1} parent=11 // pred_fallthru
          _
        // Predicated region
        $region17: #{tpu_custom_call.1} parent=11 // pred_check
          %p281 = pneg %p111
        $region18: #{tpu_custom_call.1} parent=11 // pred_check_branch
          %283 = sbr.rel (%p281) target = $region20
        $region19: #{tpu_custom_call.1} parent=11 // pred_region
          _
        $region20: #{tpu_custom_call.1} parent=11 // pred_fallthru
          _
        // Predicated region
        $region21: #{tpu_custom_call.1} parent=11 // pred_check
          %p284 = pneg %p132
        $region22: #{tpu_custom_call.1} parent=11 // pred_check_branch
          %286 = sbr.rel (%p284) target = $region24
        $region23: #{tpu_custom_call.1} parent=11 // pred_region
          _
        $region24: #{tpu_custom_call.1} parent=11 // pred_fallthru
          _
        // Predicated region
        $region25: #{tpu_custom_call.1} parent=11 // pred_check
          %p287 = pneg %p153
        $region26: #{tpu_custom_call.1} parent=11 // pred_check_branch
          %289 = sbr.rel (%p287) target = $region28
        $region27: #{tpu_custom_call.1} parent=11 // pred_region
          _
        $region28: #{tpu_custom_call.1} parent=11 // pred_fallthru
          _
        // Predicated region
        $region29: #{tpu_custom_call.1} parent=11 // pred_check
          %p290 = pneg %p174
        $region30: #{tpu_custom_call.1} parent=11 // pred_check_branch
          %292 = sbr.rel (%p290) target = $region32
        $region31: #{tpu_custom_call.1} parent=11 // pred_region
          _
        $region32: #{tpu_custom_call.1} parent=11 // pred_fallthru
          _
        // Predicated region
        $region33: #{tpu_custom_call.1} parent=11 // pred_check
          %p293 = pneg %p195
        $region34: #{tpu_custom_call.1} parent=11 // pred_check_branch
          %295 = sbr.rel (%p293) target = $region36
        $region35: #{tpu_custom_call.1} parent=11 // pred_region
          _
        $region36: #{tpu_custom_call.1} parent=11 // pred_fallthru
          _
        // Predicated region
        $region37: #{tpu_custom_call.1} parent=11 // pred_check
          %p296 = pneg %p216
        $region38: #{tpu_custom_call.1} parent=11 // pred_check_branch
          %298 = sbr.rel (%p296) target = $region40
        $region39: #{tpu_custom_call.1} parent=11 // pred_region
          %300 = vsyncadd [#allocation3], 0
          %s301 = sshll.u32 %s8, 4
          %s302 = int_to_ptr.hbm [resolvable:$true] %s301
          %s303 = sshll.u32 [#allocation2], 4
          %s304 = int_to_ptr.vmem [resolvable:$true] %s303
          %309 = dma.hbm_to_vmem [thread:$0]  %s302, 1024, %s304, [#allocation3], 64, 64, 4
        $region40: #{tpu_custom_call.1} parent=11 // pred_fallthru
          _
        // Predicated region
        $region41: #{tpu_custom_call.1} parent=11 // pred_check
          %p310 = pneg %p237
        $region42: #{tpu_custom_call.1} parent=11 // pred_check_branch
          %312 = sbr.rel (%p310) target = $region44
        $region43: #{tpu_custom_call.1} parent=11 // pred_region
          _
        $region44: #{tpu_custom_call.1} parent=11 // pred_fallthru
          _
      $region12: #{tpu_custom_call.1} parent=5 // pred_fallthru
        _
      %p313 = scmp.lt.s32.totalorder %s17, 2
      // Predicated region
      $region45: #{tpu_custom_call.1} parent=5 // pred_check
        %p314 = pneg %p313
      $region46: #{tpu_custom_call.1} parent=5 // pred_check_branch
        %316 = sbr.rel (%p314) target = $region48
      $region47: #{tpu_custom_call.1} parent=5 // pred_region
        // Predicated region
        $region49: #{tpu_custom_call.1} parent=47 // pred_check
          %p317 = pneg %p37
        $region50: #{tpu_custom_call.1} parent=47 // pred_check_branch
          %319 = sbr.rel (%p317) target = $region52
        $region51: #{tpu_custom_call.1} parent=47 // pred_region
          %p320 = scmp.lt.s32.totalorder %s17, 1
          %s321 = scalar_select %p320, %s17, 1
          %s322 = smul.addr %s321, 5
          %s323 = smul.addr %s322, 8
          %s324 = scalar_lea.vmem %s0, %s323
        $region52: #{tpu_custom_call.1} parent=47 // pred_fallthru
          _
        // Predicated region
        $region53: #{tpu_custom_call.1} parent=47 // pred_check
          %p325 = pneg %p63
        $region54: #{tpu_custom_call.1} parent=47 // pred_check_branch
          %327 = sbr.rel (%p325) target = $region56
        $region55: #{tpu_custom_call.1} parent=47 // pred_region
          %p328 = scmp.lt.s32.totalorder %s17, 1
          %s329 = scalar_select %p328, %s17, 1
          %s330 = smul.addr %s329, 2
          %s331 = scalar_lea.vmem %s1, %s330
        $region56: #{tpu_custom_call.1} parent=47 // pred_fallthru
          _
      $region48: #{tpu_custom_call.1} parent=5 // pred_fallthru
        _
      %p332 = scmp.le.s32.totalorder 1, %s17
      %p333 = scmp.lt.s32.totalorder %s17, 3
      %p334 = pnand %p332, %p333
      %p335 = pneg %p334
      // Predicated region
      $region57: #{tpu_custom_call.1} parent=5 // pred_check
        _
      $region58: #{tpu_custom_call.1} parent=5 // pred_check_branch
        %337 = sbr.rel (%p334) target = $region60
      $region59: #{tpu_custom_call.1} parent=5 // pred_region
        %s338 = ssub.s32 %s17, 1
        // Predicated region
        $region61: #{tpu_custom_call.1} parent=59 // pred_check
          %p339 = pneg %p216
        $region62: #{tpu_custom_call.1} parent=59 // pred_check_branch
          %341 = sbr.rel (%p339) target = $region64
        $region63: #{tpu_custom_call.1} parent=59 // pred_region
          %343 = dma.done [#allocation3], 1024
        $region64: #{tpu_custom_call.1} parent=59 // pred_fallthru
          _
        %p344 = scmp.lt.s32.totalorder %s22, 1
        %s345 = scalar_select %p344, %s22, 1
        %s346 = smul.addr %s345, 5
        %s347 = smul.addr %s346, 8
        %s348 = scalar_lea.vmem %s0, %s347
        %p349 = pneg %p43
        %p350 = pneg %p40
        %p351 = scmp.lt.s32.totalorder %s22, 1
        %s352 = scalar_select %p351, %s22, 1
        %s353 = smul.addr %s352, 2
        %s354 = scalar_lea.vmem %s1, %s353
        %p355 = pneg %p69
        %p356 = pneg %p66
        %p357 = pneg %p90
        %p358 = pneg %p87
        %p359 = pneg %p111
        %p360 = pneg %p108
        %p361 = pneg %p132
        %p362 = pneg %p129
        %p363 = pneg %p153
        %p364 = pneg %p150
        %p365 = pneg %p174
        %p366 = pneg %p171
        %p367 = pneg %p195
        %p368 = pneg %p192
        %p369 = pneg %p216
        %p370 = pneg %p213
        %p371 = pneg %p237
        %p372 = pneg %p234
        %p373 = pneg %p263
        %p374 = pneg %p260
        %p375 = scmp.lt.s32.totalorder %s22, 1
        %s376 = scalar_select %p375, %s22, 1
        %s377 = smul.addr %s376, 5
        %s378 = smul.addr %s377, 4
        %s379 = scalar_lea.vmem %s10, %s378
        %p380 = scmp.lt.s32.totalorder %s22, 1
        %s381 = scalar_select %p380, %s22, 1
        %s382 = smul.addr %s381, 5
        %s383 = smul.addr %s382, 8
        %s384 = scalar_lea.vmem %s0, %s383
        %p385 = scmp.lt.s32.totalorder %s22, 1
        %s386 = scalar_select %p385, %s22, 1
        %s387 = smul.addr %s386, 2
        %s388 = scalar_lea.vmem %s1, %s387
        %p389 = scmp.lt.s32.totalorder %s22, 1
        %s390 = scalar_select %p389, %s22, 1
        %s391 = smul.addr %s390, 5
        %s392 = smul.addr %s391, 4
        %s393 = scalar_lea.vmem %s10, %s392
        %v395 = vld [vmem:[%s384] sm:$0xff]
        %v396 = vld [vmem:[%s384 + $0x8] sm:$0xff]
        %v397 = vld [vmem:[%s384 + $0x10] sm:$0xff]
        %v398 = vld [vmem:[%s384 + $0x18] sm:$0xff]
        %v399 = vld [vmem:[%s384 + $0x20] sm:$0x7]
        %v400 = vpack.c.bf16 %v395, %v395
        %v401 = vpack.c.bf16 %v396, %v396
        %v402 = vpack.c.bf16 %v397, %v397
        %v403 = vpack.c.bf16 %v398, %v398
        %v404 = vpack.c.bf16 %v399, %v399
        %v405 = vld [vmem:[%s2] sm:$0xff]
        %v406 = vld [vmem:[%s2 + $0x8] sm:$0xff]
        %v407 = vld [vmem:[%s3] sm:$0xff]
        %v408 = vld [vmem:[%s3 + $0x8] sm:$0xff]
        %v414 = vunpack.c.l.b16 %v400
        %v415 = vunpack.c.l.b16 %v401
        %v416 = vunpack.c.l.b16 %v402
        %v417 = vunpack.c.l.b16 %v403
        %v418 = vunpack.c.l.b16 %v404
        %v419 = vpack.c.b16 %v415, %v414
        %v420 = vpack.c.b16 %v417, %v416
        %v421 = vpack.c.b16 %v418, %v418
        %vm422 = vsmask.f32 7424
        %v424 = vshrl.u32 %v419, 16
        %v426 = vshll.u32 %v419, 16
        %v428 = vrot.slane %v426, 1
        %v429 = vor.u32 %v424, %v428
        %v431 = vshll.u32 %v420, 16
        %v433 = vrot.slane %v431, 1
        %v434 = vsel %vm422, %v429, %v433
        %v435 = vshrl.u32 %v420, 16
        %v437 = vor.u32 %v435, %v433
        %v439 = vshll.u32 %v421, 16
        %v441 = vrot.slane %v439, 1
        %v442 = vsel %vm422, %v437, %v441
        %v443 = vshrl.u32 %v421, 16
        %v445 = vor.u32 %v443, %v441
        %v448 = vunpack.c.l.b16 %v407
        %v449 = vunpack.c.h.b16 %v407
        %v450 = vunpack.c.l.b16 %v408
        %v451 = vunpack.c.h.b16 %v408
        %v452 = vpack.c.b16 %v450, %v448
        %v453 = vpack.c.b16 %v451, %v449
        %vm456 = vcmask 130048
        %v458 = vsel %vm456, %v434, 0
        %v461 = vsel %vm456, %v442, 0
        %v464 = vsel %vm456, %v445, 0
        %466 = vmatpush.bf16.msra.mxu0 0
        %467 = vmatpush.bf16.msra.mxu0 0
        %468 = vmatpush.bf16.msra.mxu0 0
        %469 = vmatpush.bf16.msra.mxu0 0
        %470 = vmatpush.bf16.msra.mxu0 0
        %471 = vmatpush.bf16.msra.mxu0 0
        %472 = vmatpush.bf16.msra.mxu0 0
        %473 = vmatpush.bf16.msra.mxu0 %v452
        %474 = vmatmul.bf16.gmra.mxu0 %v458
        %v475 = vpop.f32.mrf.mxu0
        %v476 = vadd.f32 0.0, %v475
        %v477 = vpop.f32.mrf.mxu0
        %v478 = vadd.f32 0.0, %v477
        %479 = vmatmul.bf16.gmra.mxu0 %v461
        %v480 = vpop.f32.mrf.mxu0
        %v481 = vadd.f32 0.0, %v480
        %v482 = vpop.f32.mrf.mxu0
        %v483 = vadd.f32 0.0, %v482
        %484 = vmatmul.bf16.gmra.mxu0 %v464
        %v485 = vpop.f32.mrf.mxu0
        %v486 = vadd.f32 0.0, %v485
        %v487 = vpop.f32.mrf.mxu0
        %488 = vdwg.mxu0
        %489 = vmatpush.bf16.msra.mxu0 0
        %490 = vmatpush.bf16.msra.mxu0 0
        %491 = vmatpush.bf16.msra.mxu0 0
        %492 = vmatpush.bf16.msra.mxu0 0
        %493 = vmatpush.bf16.msra.mxu0 0
        %494 = vmatpush.bf16.msra.mxu0 0
        %495 = vmatpush.bf16.msra.mxu0 0
        %496 = vmatpush.bf16.msra.mxu0 %v453
        %497 = vmatmul.bf16.gmra.mxu0 %v458
        %v498 = vpop.f32.mrf.mxu0
        %v499 = vadd.f32 0.0, %v498
        %v500 = vpop.f32.mrf.mxu0
        %v501 = vadd.f32 0.0, %v500
        %502 = vmatmul.bf16.gmra.mxu0 %v461
        %v503 = vpop.f32.mrf.mxu0
        %v504 = vadd.f32 0.0, %v503
        %v505 = vpop.f32.mrf.mxu0
        %v506 = vadd.f32 0.0, %v505
        %507 = vmatmul.bf16.gmra.mxu0 %v464
        %v508 = vpop.f32.mrf.mxu0
        %v509 = vadd.f32 0.0, %v508
        %v510 = vpop.f32.mrf.mxu0
        %511 = vdwg.mxu0
        %v514 = vunpack.c.l.b16 %v405
        %v515 = vunpack.c.h.b16 %v405
        %v516 = vunpack.c.l.b16 %v406
        %v517 = vunpack.c.h.b16 %v406
        %v518 = vpack.c.b16 %v516, %v514
        %v519 = vpack.c.b16 %v517, %v515
        %v522 = vsel %vm456, %v419, 0
        %v524 = vsel %vm456, %v420, 0
        %v526 = vsel %vm456, %v421, 0
        %528 = vmatpush.bf16.msra.mxu0 0
        %529 = vmatpush.bf16.msra.mxu0 0
        %530 = vmatpush.bf16.msra.mxu0 0
        %531 = vmatpush.bf16.msra.mxu0 0
        %532 = vmatpush.bf16.msra.mxu0 0
        %533 = vmatpush.bf16.msra.mxu0 0
        %534 = vmatpush.bf16.msra.mxu0 0
        %535 = vmatpush.bf16.msra.mxu0 %v518
        %536 = vmatmul.bf16.gmra.mxu0 %v522
        %v537 = vpop.f32.mrf.mxu0
        %v538 = vadd.f32 %v476, %v537
        %v539 = vpop.f32.mrf.mxu0
        %v540 = vadd.f32 %v478, %v539
        %541 = vmatmul.bf16.gmra.mxu0 %v524
        %v542 = vpop.f32.mrf.mxu0
        %v543 = vadd.f32 %v481, %v542
        %v544 = vpop.f32.mrf.mxu0
        %v545 = vadd.f32 %v483, %v544
        %546 = vmatmul.bf16.gmra.mxu0 %v526
        %v547 = vpop.f32.mrf.mxu0
        %v548 = vadd.f32 %v486, %v547
        %v549 = vpop.f32.mrf.mxu0
        %550 = vdwg.mxu0
        %551 = vmatpush.bf16.msra.mxu0 0
        %552 = vmatpush.bf16.msra.mxu0 0
        %553 = vmatpush.bf16.msra.mxu0 0
        %554 = vmatpush.bf16.msra.mxu0 0
        %555 = vmatpush.bf16.msra.mxu0 0
        %556 = vmatpush.bf16.msra.mxu0 0
        %557 = vmatpush.bf16.msra.mxu0 0
        %558 = vmatpush.bf16.msra.mxu0 %v519
        %559 = vmatmul.bf16.gmra.mxu0 %v522
        %v560 = vpop.f32.mrf.mxu0
        %v561 = vadd.f32 %v499, %v560
        %v562 = vpop.f32.mrf.mxu0
        %v563 = vadd.f32 %v501, %v562
        %564 = vmatmul.bf16.gmra.mxu0 %v524
        %v565 = vpop.f32.mrf.mxu0
        %v566 = vadd.f32 %v504, %v565
        %v567 = vpop.f32.mrf.mxu0
        %v568 = vadd.f32 %v506, %v567
        %569 = vmatmul.bf16.gmra.mxu0 %v526
        %v570 = vpop.f32.mrf.mxu0
        %v571 = vadd.f32 %v509, %v570
        %v572 = vpop.f32.mrf.mxu0
        %573 = vdwg.mxu0
        %v574 = vld [vmem:[%s388] sm:$0x3]
        %v576 = vperm.slane %v574, 0
        %v577 = vperm.slane %v574, 1
        %v580 = vadd.f32 %v538, %v576
        %v581 = vadd.f32 %v561, %v577
        %v582 = vadd.f32 %v540, %v576
        %v583 = vadd.f32 %v563, %v577
        %v584 = vadd.f32 %v543, %v576
        %v585 = vadd.f32 %v566, %v577
        %v586 = vadd.f32 %v545, %v576
        %v587 = vadd.f32 %v568, %v577
        %v588 = vadd.f32 %v548, %v576
        %v589 = vadd.f32 %v571, %v577
        %v590 = vmax.f32 %v580, 0.0
        %v591 = vmax.f32 %v581, 0.0
        %v592 = vmax.f32 %v582, 0.0
        %v593 = vmax.f32 %v583, 0.0
        %v594 = vmax.f32 %v584, 0.0
        %v595 = vmax.f32 %v585, 0.0
        %v596 = vmax.f32 %v586, 0.0
        %v597 = vmax.f32 %v587, 0.0
        %v598 = vmax.f32 %v588, 0.0
        %v599 = vmax.f32 %v589, 0.0
        %600 = vadd.xlane.f32.xlu0 %v591
        %v601 = vpop.xlane.xlu0 %600
        %602 = vadd.xlane.f32.xlu0 %v593
        %v603 = vpop.xlane.xlu0 %602
        %604 = vadd.xlane.f32.xlu0 %v595
        %v605 = vpop.xlane.xlu0 %604
        %606 = vadd.xlane.f32.xlu0 %v597
        %v607 = vpop.xlane.xlu0 %606
        %vm608 = vcmask 1041408
        %v609 = vsel %vm608, %v599, 0.0
        %610 = vadd.xlane.f32.xlu0 %v609
        %v611 = vpop.xlane.xlu0 %610
        %v612 = vmul.f32 %v591, %v591
        %v613 = vmul.f32 %v593, %v593
        %v614 = vmul.f32 %v595, %v595
        %v615 = vmul.f32 %v597, %v597
        %v616 = vmul.f32 %v599, %v599
        %617 = vadd.xlane.f32.xlu0 %v612
        %v618 = vpop.xlane.xlu0 %617
        %619 = vadd.xlane.f32.xlu0 %v613
        %v620 = vpop.xlane.xlu0 %619
        %621 = vadd.xlane.f32.xlu0 %v614
        %v622 = vpop.xlane.xlu0 %621
        %623 = vadd.xlane.f32.xlu0 %v615
        %v624 = vpop.xlane.xlu0 %623
        %v625 = vsel %vm608, %v616, 0.0
        %626 = vadd.xlane.f32.xlu0 %v625
        %v627 = vpop.xlane.xlu0 %626
        %v628 = vmul.f32 %v601, 0.03125
        %v629 = vmul.f32 %v603, 0.03125
        %v630 = vmul.f32 %v605, 0.03125
        %v631 = vmul.f32 %v607, 0.03125
        %v632 = vmul.f32 %v611, 0.03125
        %v633 = vmul.f32 %v601, %v628
        %v634 = vmul.f32 %v603, %v629
        %v635 = vmul.f32 %v605, %v630
        %v636 = vmul.f32 %v607, %v631
        %v637 = vmul.f32 %v611, %v632
        %v638 = vsub.f32 %v618, %v633
        %v639 = vsub.f32 %v620, %v634
        %v640 = vsub.f32 %v622, %v635
        %v641 = vsub.f32 %v624, %v636
        %v642 = vsub.f32 %v627, %v637
        %v643 = vmul.f32 %v638, 0.032258064
        %v644 = vmul.f32 %v639, 0.032258064
        %v645 = vmul.f32 %v640, 0.032258064
        %v646 = vmul.f32 %v641, 0.032258064
        %v647 = vmul.f32 %v642, 0.032258064
        %v648 = vmax.f32 %v643, 0.0
        %v649 = vmax.f32 %v644, 0.0
        %v650 = vmax.f32 %v645, 0.0
        %v651 = vmax.f32 %v646, 0.0
        %v652 = vmax.f32 %v647, 0.0
        %v653 = vrsqrt.pop %v648
        %v654 = vmul.f32 %v653, %v648
        %v655 = vmul.f32 %v654, %v653
        %v656 = vmul.f32 0.5, %v655
        %v657 = vsub.f32 1.5, %v656
        %v658 = vmul.f32 %v653, %v657
        %v659 = vmul.f32 %v648, %v658
        %vm660 = vcmp.eq.f32.partialorder %v648, inf
        %v661 = vsel %vm660, %v648, %v659
        %vm662 = vcmp.eq.f32.partialorder %v648, 0.0
        %v663 = vand.u32 %v648, 2147483648
        %v664 = vsel %vm662, %v663, %v661
        %v665 = vrsqrt.pop %v649
        %v666 = vmul.f32 %v665, %v649
        %v667 = vmul.f32 %v666, %v665
        %v668 = vmul.f32 0.5, %v667
        %v669 = vsub.f32 1.5, %v668
        %v670 = vmul.f32 %v665, %v669
        %v671 = vmul.f32 %v649, %v670
        %vm672 = vcmp.eq.f32.partialorder %v649, inf
        %v673 = vsel %vm672, %v649, %v671
        %vm674 = vcmp.eq.f32.partialorder %v649, 0.0
        %v675 = vand.u32 %v649, 2147483648
        %v676 = vsel %vm674, %v675, %v673
        %v677 = vrsqrt.pop %v650
        %v678 = vmul.f32 %v677, %v650
        %v679 = vmul.f32 %v678, %v677
        %v680 = vmul.f32 0.5, %v679
        %v681 = vsub.f32 1.5, %v680
        %v682 = vmul.f32 %v677, %v681
        %v683 = vmul.f32 %v650, %v682
        %vm684 = vcmp.eq.f32.partialorder %v650, inf
        %v685 = vsel %vm684, %v650, %v683
        %vm686 = vcmp.eq.f32.partialorder %v650, 0.0
        %v687 = vand.u32 %v650, 2147483648
        %v688 = vsel %vm686, %v687, %v685
        %v689 = vrsqrt.pop %v651
        %v690 = vmul.f32 %v689, %v651
        %v691 = vmul.f32 %v690, %v689
        %v692 = vmul.f32 0.5, %v691
        %v693 = vsub.f32 1.5, %v692
        %v694 = vmul.f32 %v689, %v693
        %v695 = vmul.f32 %v651, %v694
        %vm696 = vcmp.eq.f32.partialorder %v651, inf
        %v697 = vsel %vm696, %v651, %v695
        %vm698 = vcmp.eq.f32.partialorder %v651, 0.0
        %v699 = vand.u32 %v651, 2147483648
        %v700 = vsel %vm698, %v699, %v697
        %v701 = vrsqrt.pop %v652
        %v702 = vmul.f32 %v701, %v652
        %v703 = vmul.f32 %v702, %v701
        %v704 = vmul.f32 0.5, %v703
        %v705 = vsub.f32 1.5, %v704
        %v706 = vmul.f32 %v701, %v705
        %v707 = vmul.f32 %v652, %v706
        %vm708 = vcmp.eq.f32.partialorder %v652, inf
        %v709 = vsel %vm708, %v652, %v707
        %vm710 = vcmp.eq.f32.partialorder %v652, 0.0
        %v711 = vand.u32 %v652, 2147483648
        %v712 = vsel %vm710, %v711, %v709
        %v713 = vadd.f32 %v664, 1e-06
        %v714 = vadd.f32 %v676, 1e-06
        %v715 = vadd.f32 %v688, 1e-06
        %v716 = vadd.f32 %v700, 1e-06
        %v717 = vadd.f32 %v712, 1e-06
        %v718 = vrcp.pop %v713
        %v719 = vrcp.pop %v714
        %v720 = vrcp.pop %v715
        %v721 = vrcp.pop %v716
        %v722 = vrcp.pop %v717
        %v723 = vld [vmem:[%s4] sm:$0x1]
        %v724 = vsub.f32 %v591, %v628
        %v725 = vsub.f32 %v593, %v629
        %v726 = vsub.f32 %v595, %v630
        %v727 = vsub.f32 %v597, %v631
        %v728 = vsub.f32 %v599, %v632
        %v729 = vmul.f32 %v724, %v718
        %v730 = vmul.f32 %v725, %v719
        %v731 = vmul.f32 %v726, %v720
        %v732 = vmul.f32 %v727, %v721
        %v733 = vmul.f32 %v728, %v722
        %v735 = vperm.slane %v723, 0
        %v737 = vmul.f32 %v735, %v729
        %v738 = vmul.f32 %v735, %v730
        %v739 = vmul.f32 %v735, %v731
        %v740 = vmul.f32 %v735, %v732
        %v741 = vmul.f32 %v735, %v733
        %v742 = vld [vmem:[%s5] sm:$0x1]
        %v744 = vperm.slane %v742, 0
        %v746 = vadd.f32 %v737, %v744
        %v747 = vadd.f32 %v738, %v744
        %v748 = vadd.f32 %v739, %v744
        %v749 = vadd.f32 %v740, %v744
        %v750 = vadd.f32 %v741, %v744
        %v751 = vadd.f32 %v746, %v590
        %v752 = vadd.f32 %v747, %v592
        %v753 = vadd.f32 %v748, %v594
        %v754 = vadd.f32 %v749, %v596
        %v755 = vadd.f32 %v750, %v598
        %v756 = vpack.c.bf16 %v752, %v751
        %v757 = vpack.c.bf16 %v754, %v753
        %v758 = vpack.c.bf16 %v755, %v755
        %v759 = vld [vmem:[%s6] sm:$0xf]
        %v760 = vld [vmem:[%s6 + $0x4] sm:$0xf]
        %v761 = vld [vmem:[%s6 + $0x8] sm:$0xf]
        %v762 = vld [vmem:[%s6 + $0xc] sm:$0xf]
        %v763 = vld [vmem:[%s6 + $0x10] sm:$0xf]
        %v764 = vld [vmem:[%s6 + $0x14] sm:$0xf]
        %v765 = vld [vmem:[%s6 + $0x18] sm:$0xf]
        %v766 = vld [vmem:[%s6 + $0x1c] sm:$0xf]
        %v767 = vld [vmem:[%s6 + $0x20] sm:$0xf]
        %v768 = vld [vmem:[%s6 + $0x24] sm:$0xf]
        %v769 = vld [vmem:[%s6 + $0x28] sm:$0xf]
        %v770 = vld [vmem:[%s6 + $0x2c] sm:$0xf]
        %v771 = vld [vmem:[%s6 + $0x30] sm:$0xf]
        %v772 = vld [vmem:[%s6 + $0x34] sm:$0xf]
        %v773 = vld [vmem:[%s6 + $0x38] sm:$0xf]
        %v774 = vld [vmem:[%s6 + $0x3c] sm:$0xf]
        %v775 = vld [vmem:[%s7] sm:$0x1]
        %v777 = vperm.slane %v775, 0
        %v795 = vunpack.c.l.b16 %v759
        %v796 = vunpack.c.l.b16 %v760
        %v797 = vunpack.c.l.b16 %v761
        %v798 = vunpack.c.l.b16 %v762
        %v799 = vunpack.c.l.b16 %v763
        %v800 = vunpack.c.l.b16 %v764
        %v801 = vunpack.c.l.b16 %v765
        %v802 = vunpack.c.l.b16 %v766
        %v803 = vunpack.c.l.b16 %v767
        %v804 = vunpack.c.l.b16 %v768
        %v805 = vunpack.c.l.b16 %v769
        %v806 = vunpack.c.l.b16 %v770
        %v807 = vunpack.c.l.b16 %v771
        %v808 = vunpack.c.l.b16 %v772
        %v809 = vunpack.c.l.b16 %v773
        %v810 = vunpack.c.l.b16 %v774
        %v811 = vpack.c.b16 %v796, %v795
        %v812 = vpack.c.b16 %v798, %v797
        %v813 = vpack.c.b16 %v800, %v799
        %v814 = vpack.c.b16 %v802, %v801
        %v815 = vpack.c.b16 %v804, %v803
        %v816 = vpack.c.b16 %v806, %v805
        %v817 = vpack.c.b16 %v808, %v807
        %v818 = vpack.c.b16 %v810, %v809
        %827 = vmatpush.bf16.msra.mxu0 %v818
        %828 = vmatpush.bf16.msra.mxu0 %v817
        %829 = vmatpush.bf16.msra.mxu0 %v816
        %830 = vmatpush.bf16.msra.mxu0 %v815
        %831 = vmatpush.bf16.msra.mxu0 %v814
        %832 = vmatpush.bf16.msra.mxu0 %v813
        %833 = vmatpush.bf16.msra.mxu0 %v812
        %834 = vmatpush.bf16.msra.mxu0 %v811
        %835 = vmatmul.bf16.gmra.mxu0 %v756
        %v836 = vpop.f32.mrf.mxu0
        %v837 = vadd.f32 %v777, %v836
        %v838 = vpop.f32.mrf.mxu0
        %v839 = vadd.f32 %v777, %v838
        %840 = vmatmul.bf16.gmra.mxu0 %v757
        %v841 = vpop.f32.mrf.mxu0
        %v842 = vadd.f32 %v777, %v841
        %v843 = vpop.f32.mrf.mxu0
        %v844 = vadd.f32 %v777, %v843
        %845 = vmatmul.bf16.gmra.mxu0 %v758
        %v846 = vpop.f32.mrf.mxu0
        %v847 = vadd.f32 %v777, %v846
        %v848 = vpop.f32.mrf.mxu0
        %849 = vdwg.mxu0
        %v850 = vmax.f32 %v837, 0.0
        %v851 = vmax.f32 %v839, 0.0
        %v852 = vmax.f32 %v842, 0.0
        %v853 = vmax.f32 %v844, 0.0
        %v854 = vmax.f32 %v847, 0.0
        %v855 = vpack.c.bf16 %v851, %v850
        %v856 = vpack.c.bf16 %v853, %v852
        %v857 = vpack.c.bf16 %v854, %v854
        %v858 = vld [vmem:[#allocation2] sm:$0xf]
        %v859 = vld [vmem:[#allocation2 + $0x4] sm:$0xf]
        %v860 = vld [vmem:[#allocation2 + $0x8] sm:$0xf]
        %v861 = vld [vmem:[#allocation2 + $0xc] sm:$0xf]
        %v862 = vld [vmem:[#allocation2 + $0x10] sm:$0xf]
        %v863 = vld [vmem:[#allocation2 + $0x14] sm:$0xf]
        %v864 = vld [vmem:[#allocation2 + $0x18] sm:$0xf]
        %v865 = vld [vmem:[#allocation2 + $0x1c] sm:$0xf]
        %v866 = vld [vmem:[#allocation2 + $0x20] sm:$0xf]
        %v867 = vld [vmem:[#allocation2 + $0x24] sm:$0xf]
        %v868 = vld [vmem:[#allocation2 + $0x28] sm:$0xf]
        %v869 = vld [vmem:[#allocation2 + $0x2c] sm:$0xf]
        %v870 = vld [vmem:[#allocation2 + $0x30] sm:$0xf]
        %v871 = vld [vmem:[#allocation2 + $0x34] sm:$0xf]
        %v872 = vld [vmem:[#allocation2 + $0x38] sm:$0xf]
        %v873 = vld [vmem:[#allocation2 + $0x3c] sm:$0xf]
        %v874 = vld [vmem:[%s9] sm:$0x1]
        %v876 = vperm.slane %v874, 0
        %v894 = vunpack.c.l.b16 %v858
        %v895 = vunpack.c.l.b16 %v859
        %v896 = vunpack.c.l.b16 %v860
        %v897 = vunpack.c.l.b16 %v861
        %v898 = vunpack.c.l.b16 %v862
        %v899 = vunpack.c.l.b16 %v863
        %v900 = vunpack.c.l.b16 %v864
        %v901 = vunpack.c.l.b16 %v865
        %v902 = vunpack.c.l.b16 %v866
        %v903 = vunpack.c.l.b16 %v867
        %v904 = vunpack.c.l.b16 %v868
        %v905 = vunpack.c.l.b16 %v869
        %v906 = vunpack.c.l.b16 %v870
        %v907 = vunpack.c.l.b16 %v871
        %v908 = vunpack.c.l.b16 %v872
        %v909 = vunpack.c.l.b16 %v873
        %v910 = vpack.c.b16 %v895, %v894
        %v911 = vpack.c.b16 %v897, %v896
        %v912 = vpack.c.b16 %v899, %v898
        %v913 = vpack.c.b16 %v901, %v900
        %v914 = vpack.c.b16 %v903, %v902
        %v915 = vpack.c.b16 %v905, %v904
        %v916 = vpack.c.b16 %v907, %v906
        %v917 = vpack.c.b16 %v909, %v908
        %926 = vmatpush.bf16.msra.mxu0 %v917
        %927 = vmatpush.bf16.msra.mxu0 %v916
        %928 = vmatpush.bf16.msra.mxu0 %v915
        %929 = vmatpush.bf16.msra.mxu0 %v914
        %930 = vmatpush.bf16.msra.mxu0 %v913
        %931 = vmatpush.bf16.msra.mxu0 %v912
        %932 = vmatpush.bf16.msra.mxu0 %v911
        %933 = vmatpush.bf16.msra.mxu0 %v910
        %934 = vmatmul.bf16.gmra.mxu0 %v855
        %v935 = vpop.f32.mrf.mxu0
        %v936 = vadd.f32 %v876, %v935
        %v937 = vpop.f32.mrf.mxu0
        %v938 = vadd.f32 %v876, %v937
        %939 = vmatmul.bf16.gmra.mxu0 %v856
        %v940 = vpop.f32.mrf.mxu0
        %v941 = vadd.f32 %v876, %v940
        %v942 = vpop.f32.mrf.mxu0
        %v943 = vadd.f32 %v876, %v942
        %944 = vmatmul.bf16.gmra.mxu0 %v857
        %v945 = vpop.f32.mrf.mxu0
        %v946 = vadd.f32 %v876, %v945
        %v947 = vpop.f32.mrf.mxu0
        %948 = vdwg.mxu0
        %v949 = vadd.f32 %v936, %v751
        %v950 = vadd.f32 %v938, %v752
        %v951 = vadd.f32 %v941, %v753
        %v952 = vadd.f32 %v943, %v754
        %v953 = vadd.f32 %v946, %v755
        %v954 = vpack.c.bf16 %v949, %v949
        %v955 = vpack.c.bf16 %v950, %v950
        %v956 = vpack.c.bf16 %v951, %v951
        %v957 = vpack.c.bf16 %v952, %v952
        %v958 = vpack.c.bf16 %v953, %v953
        %959 = vst [vmem:[%s393] sm:$0xf] %v954
        %960 = vst [vmem:[%s393 + $0x4] sm:$0xf] %v955
        %961 = vst [vmem:[%s393 + $0x8] sm:$0xf] %v956
        %962 = vst [vmem:[%s393 + $0xc] sm:$0xf] %v957
        %963 = vst [vmem:[%s393 + $0x10] sm:$0x1] %v958
        %p964 = scmp.lt.s32.totalorder %s22, 1
        %s965 = scalar_select %p964, %s22, 1
        %s966 = smul.addr %s965, 5
        %s967 = smul.addr %s966, 4
        %s968 = scalar_lea.vmem %s10, %s967
        // Predicated region
        $region65: #{tpu_custom_call.1} parent=59 // pred_check
          %p969 = pneg %p260
        $region66: #{tpu_custom_call.1} parent=59 // pred_check_branch
          %971 = sbr.rel (%p969) target = $region68
        $region67: #{tpu_custom_call.1} parent=59 // pred_region
          _
        $region68: #{tpu_custom_call.1} parent=59 // pred_fallthru
          _
      $region60: #{tpu_custom_call.1} parent=5 // pred_fallthru
        _
      %p972 = scmp.le.s32.totalorder 2, %s17
      // Predicated region
      $region69: #{tpu_custom_call.1} parent=5 // pred_check
        %p973 = pneg %p972
      $region70: #{tpu_custom_call.1} parent=5 // pred_check_branch
        %975 = sbr.rel (%p973) target = $region72
      $region71: #{tpu_custom_call.1} parent=5 // pred_region
        %s976 = ssub.s32 %s17, 2
        // Predicated region
        $region73: #{tpu_custom_call.1} parent=71 // pred_check
          %p977 = pneg %p266
        $region74: #{tpu_custom_call.1} parent=71 // pred_check_branch
          %979 = sbr.rel (%p977) target = $region76
        $region75: #{tpu_custom_call.1} parent=71 // pred_region
          %p980 = scmp.lt.s32.totalorder %s23, 1
          %s981 = scalar_select %p980, %s23, 1
          %s982 = smul.addr %s981, 5
          %s983 = smul.addr %s982, 4
          %s984 = scalar_lea.vmem %s10, %s983
        $region76: #{tpu_custom_call.1} parent=71 // pred_fallthru
          _
      $region72: #{tpu_custom_call.1} parent=5 // pred_fallthru
        _
    $region6: #{tpu_custom_call.1} parent=1 // loop_footer
      %s21 = sadd.s32 1, %s17
    $region7: #{tpu_custom_call.1} parent=1 // loop_footer_branch
      %16 = sbr.rel target = $region3
    $region8: #{tpu_custom_call.1} parent=1 // loop_exit
      _
    %985 = vsyncpa [#allocation3], 1
    %s986 = scalar_lea.sflag [#allocation3], 1
    %987 = vsyncpa %s986, 1

// kernel: tpu_custom_call.1
$region0: #{tpu_custom_call.1}
  #allocation0 [shape = 'u32[]', space=smem, size = 0x4, offset = 0x4, fixed_abs, tag = 'smem constant byte address 0x4 - core index']
  #allocation1 [shape = 'u32[72,128]{1,0:T(1,128)}', space=vmem, size = 0x9000, scoped, tag = 'internal scratch']
  %s0 = inlined_call_operand.vmem [shape: f32[2,35,16], index: 0, kind: input, shape index: {}]
  %s1 = inlined_call_operand.vmem [shape: f32[2,1,256], index: 1, kind: input, shape index: {}]
  %s2 = inlined_call_operand.vmem [shape: bf16[16,256], index: 2, kind: input, shape index: {}]
  %s3 = inlined_call_operand.vmem [shape: bf16[16,256], index: 3, kind: input, shape index: {}]
  %s4 = inlined_call_operand.vmem [shape: f32[1,128], index: 4, kind: input, shape index: {}]
  %s5 = inlined_call_operand.vmem [shape: f32[1,128], index: 5, kind: input, shape index: {}]
  %s6 = inlined_call_operand.vmem [shape: bf16[128,128], index: 6, kind: input, shape index: {}]
  %s7 = inlined_call_operand.vmem [shape: f32[1,128], index: 7, kind: input, shape index: {}]
  %s8 = inlined_call_operand.hbm [shape: bf16[128,128], index: 8, kind: input, shape index: {}]
  %s9 = inlined_call_operand.vmem [shape: f32[1,128], index: 9, kind: input, shape index: {}]
  %s10 = inlined_call_operand.vmem [shape: bf16[2,34,128], index: 10, kind: output, shape index: {}]
  %s11 = sld [smem:[#allocation0]]
  $region77: #{tpu_custom_call.1} parent=0
    _
  %s13 = ssub.s32 1, %s11
  %s14 = scalar_select 0, %s13, %s11
  $region1: #{tpu_custom_call.1} parent=0
    #allocation2 [shape = 'u8[32768]{0}', space=vmem, size = 0x8000, scoped, tag = 'input window, operand 8, single buffered']
    #allocation3 [shape = 's32[2]{0}', space=sflag, size = 0x8, scoped, tag = 'scoped memory for tpu_custom_call.1']
    %15 = vsyncpa [#allocation3], 0
    loop: start=0, step=1, limit=4
    $region2: #{tpu_custom_call.1} parent=1 // loop_pre_header
      _
    $region3: #{tpu_custom_call.1} parent=1 // loop_header
      %s17 = sphi 0, %s21
      %p18 = scmp.ge.s32.totalorder %s17, 4
      %s27 = sphi 0, %s29
      %s30 = sphi 0, %s27
      %s31 = sphi 0, %s30
      %s47 = sphi 0, %s31
      %s53 = sphi 0, %s55
      %s56 = sphi 0, %s53
      %s57 = sphi 0, %s56
      %s73 = sphi 0, %s57
      %s77 = sphi 0, %s77
      %s79 = sphi 0, %s77
      %s80 = sphi 0, %s79
      %s94 = sphi 0, %s80
      %s98 = sphi 0, %s98
      %s100 = sphi 0, %s98
      %s101 = sphi 0, %s100
      %s115 = sphi 0, %s101
      %s119 = sphi 0, %s119
      %s121 = sphi 0, %s119
      %s122 = sphi 0, %s121
      %s136 = sphi 0, %s122
      %s140 = sphi 0, %s140
      %s142 = sphi 0, %s140
      %s143 = sphi 0, %s142
      %s157 = sphi 0, %s143
      %s161 = sphi 0, %s161
      %s163 = sphi 0, %s161
      %s164 = sphi 0, %s163
      %s178 = sphi 0, %s164
      %s182 = sphi 0, %s182
      %s184 = sphi 0, %s182
      %s185 = sphi 0, %s184
      %s199 = sphi 0, %s185
      %s203 = sphi 0, %s203
      %s205 = sphi 0, %s203
      %s206 = sphi 0, %s205
      %s220 = sphi 0, %s206
      %s224 = sphi 0, %s224
      %s226 = sphi 0, %s224
      %s227 = sphi 0, %s226
      %s241 = sphi 0, %s227
      %s247 = sphi 0, %s249
      %s250 = sphi 0, %s247
      %s251 = sphi 0, %s250
      %s267 = sphi 0, %s251
    $region4: #{tpu_custom_call.1} parent=1 // loop_header_branch
      %20 = sbr.rel (%p18) target = $region8
    $region5: #{tpu_custom_call.1} parent=1 // loop_body
      %s22 = ssub.s32 %s17, 1
      %s23 = ssub.s32 %s17, 2
      %s24 = sadd.s32 %s17, 1
      %s25 = ssub.s32 %s17, %s24
      %p26 = scmp.eq.s32.totalorder %s25, 0
      %s28 = sadd.s32 %s27, 1
      %s29 = scalar_select %p26, %s27, %s28
      %p32 = pneg %p26
      %p33 = scmp.eq.s32.totalorder %s17, 1
      %p34 = por %p32, %p33
      %p35 = scmp.ne.s32.totalorder %s27, %s30
      %p36 = scmp.eq.s32.totalorder %s17, 0
      %p37 = por %p35, %p36
      %p38 = scmp.ne.s32.totalorder %s27, %s30
      %p39 = scmp.eq.s32.totalorder %s22, 1
      %p40 = por %p38, %p39
      %p41 = scmp.ne.s32.totalorder %s30, %s31
      %p42 = scmp.eq.s32.totalorder %s22, 0
      %p43 = por %p41, %p42
      %p44 = scmp.ne.s32.totalorder %s30, %s31
      %p45 = scmp.eq.s32.totalorder %s23, 1
      %p46 = por %p44, %p45
      %p48 = scmp.ne.s32.totalorder %s31, %s47
      %p49 = scmp.eq.s32.totalorder %s23, 0
      %p50 = por %p48, %p49
      %s51 = ssub.s32 %s17, %s24
      %p52 = scmp.eq.s32.totalorder %s51, 0
      %s54 = sadd.s32 %s53, 1
      %s55 = scalar_select %p52, %s53, %s54
      %p58 = pneg %p52
      %p59 = scmp.eq.s32.totalorder %s17, 1
      %p60 = por %p58, %p59
      %p61 = scmp.ne.s32.totalorder %s53, %s56
      %p62 = scmp.eq.s32.totalorder %s17, 0
      %p63 = por %p61, %p62
      %p64 = scmp.ne.s32.totalorder %s53, %s56
      %p65 = scmp.eq.s32.totalorder %s22, 1
      %p66 = por %p64, %p65
      %p67 = scmp.ne.s32.totalorder %s56, %s57
      %p68 = scmp.eq.s32.totalorder %s22, 0
      %p69 = por %p67, %p68
      %p70 = scmp.ne.s32.totalorder %s56, %s57
      %p71 = scmp.eq.s32.totalorder %s23, 1
      %p72 = por %p70, %p71
      %p74 = scmp.ne.s32.totalorder %s57, %s73
      %p75 = scmp.eq.s32.totalorder %s23, 0
      %p76 = por %p74, %p75
      %s78 = sadd.s32 %s77, 1
      %p81 = scmp.eq.s32.totalorder %s17, 1
      %p82 = scmp.ne.s32.totalorder %s77, %s79
      %p83 = scmp.eq.s32.totalorder %s17, 0
      %p84 = por %p82, %p83
      %p85 = scmp.ne.s32.totalorder %s77, %s79
      %p86 = scmp.eq.s32.totalorder %s22, 1
      %p87 = por %p85, %p86
      %p88 = scmp.ne.s32.totalorder %s79, %s80
      %p89 = scmp.eq.s32.totalorder %s22, 0
      %p90 = por %p88, %p89
      %p91 = scmp.ne.s32.totalorder %s79, %s80
      %p92 = scmp.eq.s32.totalorder %s23, 1
      %p93 = por %p91, %p92
      %p95 = scmp.ne.s32.totalorder %s80, %s94
      %p96 = scmp.eq.s32.totalorder %s23, 0
      %p97 = por %p95, %p96
      %s99 = sadd.s32 %s98, 1
      %p102 = scmp.eq.s32.totalorder %s17, 1
      %p103 = scmp.ne.s32.totalorder %s98, %s100
      %p104 = scmp.eq.s32.totalorder %s17, 0
      %p105 = por %p103, %p104
      %p106 = scmp.ne.s32.totalorder %s98, %s100
      %p107 = scmp.eq.s32.totalorder %s22, 1
      %p108 = por %p106, %p107
      %p109 = scmp.ne.s32.totalorder %s100, %s101
      %p110 = scmp.eq.s32.totalorder %s22, 0
      %p111 = por %p109, %p110
      %p112 = scmp.ne.s32.totalorder %s100, %s101
      %p113 = scmp.eq.s32.totalorder %s23, 1
      %p114 = por %p112, %p113
      %p116 = scmp.ne.s32.totalorder %s101, %s115
      %p117 = scmp.eq.s32.totalorder %s23, 0
      %p118 = por %p116, %p117
      %s120 = sadd.s32 %s119, 1
      %p123 = scmp.eq.s32.totalorder %s17, 1
      %p124 = scmp.ne.s32.totalorder %s119, %s121
      %p125 = scmp.eq.s32.totalorder %s17, 0
      %p126 = por %p124, %p125
      %p127 = scmp.ne.s32.totalorder %s119, %s121
      %p128 = scmp.eq.s32.totalorder %s22, 1
      %p129 = por %p127, %p128
      %p130 = scmp.ne.s32.totalorder %s121, %s122
      %p131 = scmp.eq.s32.totalorder %s22, 0
      %p132 = por %p130, %p131
      %p133 = scmp.ne.s32.totalorder %s121, %s122
      %p134 = scmp.eq.s32.totalorder %s23, 1
      %p135 = por %p133, %p134
      %p137 = scmp.ne.s32.totalorder %s122, %s136
      %p138 = scmp.eq.s32.totalorder %s23, 0
      %p139 = por %p137, %p138
      %s141 = sadd.s32 %s140, 1
      %p144 = scmp.eq.s32.totalorder %s17, 1
      %p145 = scmp.ne.s32.totalorder %s140, %s142
      %p146 = scmp.eq.s32.totalorder %s17, 0
      %p147 = por %p145, %p146
      %p148 = scmp.ne.s32.totalorder %s140, %s142
      %p149 = scmp.eq.s32.totalorder %s22, 1
      %p150 = por %p148, %p149
      %p151 = scmp.ne.s32.totalorder %s142, %s143
      %p152 = scmp.eq.s32.totalorder %s22, 0
      %p153 = por %p151, %p152
      %p154 = scmp.ne.s32.totalorder %s142, %s143
      %p155 = scmp.eq.s32.totalorder %s23, 1
      %p156 = por %p154, %p155
      %p158 = scmp.ne.s32.totalorder %s143, %s157
      %p159 = scmp.eq.s32.totalorder %s23, 0
      %p160 = por %p158, %p159
      %s162 = sadd.s32 %s161, 1
      %p165 = scmp.eq.s32.totalorder %s17, 1
      %p166 = scmp.ne.s32.totalorder %s161, %s163
      %p167 = scmp.eq.s32.totalorder %s17, 0
      %p168 = por %p166, %p167
      %p169 = scmp.ne.s32.totalorder %s161, %s163
      %p170 = scmp.eq.s32.totalorder %s22, 1
      %p171 = por %p169, %p170
      %p172 = scmp.ne.s32.totalorder %s163, %s164
      %p173 = scmp.eq.s32.totalorder %s22, 0
      %p174 = por %p172, %p173
      %p175 = scmp.ne.s32.totalorder %s163, %s164
      %p176 = scmp.eq.s32.totalorder %s23, 1
      %p177 = por %p175, %p176
      %p179 = scmp.ne.s32.totalorder %s164, %s178
      %p180 = scmp.eq.s32.totalorder %s23, 0
      %p181 = por %p179, %p180
      %s183 = sadd.s32 %s182, 1
      %p186 = scmp.eq.s32.totalorder %s17, 1
      %p187 = scmp.ne.s32.totalorder %s182, %s184
      %p188 = scmp.eq.s32.totalorder %s17, 0
      %p189 = por %p187, %p188
      %p190 = scmp.ne.s32.totalorder %s182, %s184
      %p191 = scmp.eq.s32.totalorder %s22, 1
      %p192 = por %p190, %p191
      %p193 = scmp.ne.s32.totalorder %s184, %s185
      %p194 = scmp.eq.s32.totalorder %s22, 0
      %p195 = por %p193, %p194
      %p196 = scmp.ne.s32.totalorder %s184, %s185
      %p197 = scmp.eq.s32.totalorder %s23, 1
      %p198 = por %p196, %p197
      %p200 = scmp.ne.s32.totalorder %s185, %s199
      %p201 = scmp.eq.s32.totalorder %s23, 0
      %p202 = por %p200, %p201
      %s204 = sadd.s32 %s203, 1
      %p207 = scmp.eq.s32.totalorder %s17, 1
      %p208 = scmp.ne.s32.totalorder %s203, %s205
      %p209 = scmp.eq.s32.totalorder %s17, 0
      %p210 = por %p208, %p209
      %p211 = scmp.ne.s32.totalorder %s203, %s205
      %p212 = scmp.eq.s32.totalorder %s22, 1
      %p213 = por %p211, %p212
      %p214 = scmp.ne.s32.totalorder %s205, %s206
      %p215 = scmp.eq.s32.totalorder %s22, 0
      %p216 = por %p214, %p215
      %p217 = scmp.ne.s32.totalorder %s205, %s206
      %p218 = scmp.eq.s32.totalorder %s23, 1
      %p219 = por %p217, %p218
      %p221 = scmp.ne.s32.totalorder %s206, %s220
      %p222 = scmp.eq.s32.totalorder %s23, 0
      %p223 = por %p221, %p222
      %s225 = sadd.s32 %s224, 1
      %p228 = scmp.eq.s32.totalorder %s17, 1
      %p229 = scmp.ne.s32.totalorder %s224, %s226
      %p230 = scmp.eq.s32.totalorder %s17, 0
      %p231 = por %p229, %p230
      %p232 = scmp.ne.s32.totalorder %s224, %s226
      %p233 = scmp.eq.s32.totalorder %s22, 1
      %p234 = por %p232, %p233
      %p235 = scmp.ne.s32.totalorder %s226, %s227
      %p236 = scmp.eq.s32.totalorder %s22, 0
      %p237 = por %p235, %p236
      %p238 = scmp.ne.s32.totalorder %s226, %s227
      %p239 = scmp.eq.s32.totalorder %s23, 1
      %p240 = por %p238, %p239
      %p242 = scmp.ne.s32.totalorder %s227, %s241
      %p243 = scmp.eq.s32.totalorder %s23, 0
      %p244 = por %p242, %p243
      %s245 = ssub.s32 %s17, %s24
      %p246 = scmp.eq.s32.totalorder %s245, 0
      %s248 = sadd.s32 %s247, 1
      %s249 = scalar_select %p246, %s247, %s248
      %p252 = pneg %p246
      %p253 = scmp.eq.s32.totalorder %s17, 1
      %p254 = por %p252, %p253
      %p255 = scmp.ne.s32.totalorder %s247, %s250
      %p256 = scmp.eq.s32.totalorder %s17, 0
      %p257 = por %p255, %p256
      %p258 = scmp.ne.s32.totalorder %s247, %s250
      %p259 = scmp.eq.s32.totalorder %s22, 1
      %p260 = por %p258, %p259
      %p261 = scmp.ne.s32.totalorder %s250, %s251
      %p262 = scmp.eq.s32.totalorder %s22, 0
      %p263 = por %p261, %p262
      %p264 = scmp.ne.s32.totalorder %s250, %s251
      %p265 = scmp.eq.s32.totalorder %s23, 1
      %p266 = por %p264, %p265
      %p268 = scmp.ne.s32.totalorder %s251, %s267
      %p269 = scmp.eq.s32.totalorder %s23, 0
      %p270 = por %p268, %p269
      %p271 = scmp.le.s32.totalorder 1, %s17
      %p272 = scmp.lt.s32.totalorder %s17, 3
      %p273 = pnand %p271, %p272
      %p274 = pneg %p273
      // Predicated region
      $region9: #{tpu_custom_call.1} parent=5 // pred_check
        _
      $region10: #{tpu_custom_call.1} parent=5 // pred_check_branch
        %276 = sbr.rel (%p273) target = $region12
      $region11: #{tpu_custom_call.1} parent=5 // pred_region
        %s277 = ssub.s32 %s17, 1
        // Predicated region
        $region13: #{tpu_custom_call.1} parent=11 // pred_check
          %p278 = pneg %p90
        $region14: #{tpu_custom_call.1} parent=11 // pred_check_branch
          %280 = sbr.rel (%p278) target = $region16
        $region15: #{tpu_custom_call.1} parent=11 // pred_region
          _
        $region16: #{tpu_custom_call.1} parent=11 // pred_fallthru
          _
        // Predicated region
        $region17: #{tpu_custom_call.1} parent=11 // pred_check
          %p281 = pneg %p111
        $region18: #{tpu_custom_call.1} parent=11 // pred_check_branch
          %283 = sbr.rel (%p281) target = $region20
        $region19: #{tpu_custom_call.1} parent=11 // pred_region
          _
        $region20: #{tpu_custom_call.1} parent=11 // pred_fallthru
          _
        // Predicated region
        $region21: #{tpu_custom_call.1} parent=11 // pred_check
          %p284 = pneg %p132
        $region22: #{tpu_custom_call.1} parent=11 // pred_check_branch
          %286 = sbr.rel (%p284) target = $region24
        $region23: #{tpu_custom_call.1} parent=11 // pred_region
          _
        $region24: #{tpu_custom_call.1} parent=11 // pred_fallthru
          _
        // Predicated region
        $region25: #{tpu_custom_call.1} parent=11 // pred_check
          %p287 = pneg %p153
        $region26: #{tpu_custom_call.1} parent=11 // pred_check_branch
          %289 = sbr.rel (%p287) target = $region28
        $region27: #{tpu_custom_call.1} parent=11 // pred_region
          _
        $region28: #{tpu_custom_call.1} parent=11 // pred_fallthru
          _
        // Predicated region
        $region29: #{tpu_custom_call.1} parent=11 // pred_check
          %p290 = pneg %p174
        $region30: #{tpu_custom_call.1} parent=11 // pred_check_branch
          %292 = sbr.rel (%p290) target = $region32
        $region31: #{tpu_custom_call.1} parent=11 // pred_region
          _
        $region32: #{tpu_custom_call.1} parent=11 // pred_fallthru
          _
        // Predicated region
        $region33: #{tpu_custom_call.1} parent=11 // pred_check
          %p293 = pneg %p195
        $region34: #{tpu_custom_call.1} parent=11 // pred_check_branch
          %295 = sbr.rel (%p293) target = $region36
        $region35: #{tpu_custom_call.1} parent=11 // pred_region
          _
        $region36: #{tpu_custom_call.1} parent=11 // pred_fallthru
          _
        // Predicated region
        $region37: #{tpu_custom_call.1} parent=11 // pred_check
          %p296 = pneg %p216
        $region38: #{tpu_custom_call.1} parent=11 // pred_check_branch
          %298 = sbr.rel (%p296) target = $region40
        $region39: #{tpu_custom_call.1} parent=11 // pred_region
          %300 = vsyncadd [#allocation3], 0
          %s301 = sshll.u32 %s8, 4
          %s302 = int_to_ptr.hbm [resolvable:$true] %s301
          %s303 = sshll.u32 [#allocation2], 4
          %s304 = int_to_ptr.vmem [resolvable:$true] %s303
          %309 = dma.hbm_to_vmem [thread:$0]  %s302, 1024, %s304, [#allocation3], 64, 64, 4
        $region40: #{tpu_custom_call.1} parent=11 // pred_fallthru
          _
        // Predicated region
        $region41: #{tpu_custom_call.1} parent=11 // pred_check
          %p310 = pneg %p237
        $region42: #{tpu_custom_call.1} parent=11 // pred_check_branch
          %312 = sbr.rel (%p310) target = $region44
        $region43: #{tpu_custom_call.1} parent=11 // pred_region
          _
        $region44: #{tpu_custom_call.1} parent=11 // pred_fallthru
          _
      $region12: #{tpu_custom_call.1} parent=5 // pred_fallthru
        _
      %p313 = scmp.lt.s32.totalorder %s17, 2
      // Predicated region
      $region45: #{tpu_custom_call.1} parent=5 // pred_check
        %p314 = pneg %p313
      $region46: #{tpu_custom_call.1} parent=5 // pred_check_branch
        %316 = sbr.rel (%p314) target = $region48
      $region47: #{tpu_custom_call.1} parent=5 // pred_region
        // Predicated region
        $region49: #{tpu_custom_call.1} parent=47 // pred_check
          %p317 = pneg %p37
        $region50: #{tpu_custom_call.1} parent=47 // pred_check_branch
          %319 = sbr.rel (%p317) target = $region52
        $region51: #{tpu_custom_call.1} parent=47 // pred_region
          %p320 = scmp.lt.s32.totalorder %s17, 1
          %s321 = scalar_select %p320, %s17, 1
          %s322 = smul.addr %s321, 5
          %s323 = smul.addr %s322, 8
          %s324 = scalar_lea.vmem %s0, %s323
        $region52: #{tpu_custom_call.1} parent=47 // pred_fallthru
          _
        // Predicated region
        $region53: #{tpu_custom_call.1} parent=47 // pred_check
          %p325 = pneg %p63
        $region54: #{tpu_custom_call.1} parent=47 // pred_check_branch
          %327 = sbr.rel (%p325) target = $region56
        $region55: #{tpu_custom_call.1} parent=47 // pred_region
          %p328 = scmp.lt.s32.totalorder %s17, 1
          %s329 = scalar_select %p328, %s17, 1
          %s330 = smul.addr %s329, 2
          %s331 = scalar_lea.vmem %s1, %s330
        $region56: #{tpu_custom_call.1} parent=47 // pred_fallthru
          _
      $region48: #{tpu_custom_call.1} parent=5 // pred_fallthru
        _
      %p332 = scmp.le.s32.totalorder 1, %s17
      %p333 = scmp.lt.s32.totalorder %s17, 3
      %p334 = pnand %p332, %p333
      %p335 = pneg %p334
      // Predicated region
      $region57: #{tpu_custom_call.1} parent=5 // pred_check
        _
      $region58: #{tpu_custom_call.1} parent=5 // pred_check_branch
        %337 = sbr.rel (%p334) target = $region60
      $region59: #{tpu_custom_call.1} parent=5 // pred_region
        %s338 = ssub.s32 %s17, 1
        // Predicated region
        $region61: #{tpu_custom_call.1} parent=59 // pred_check
          %p339 = pneg %p216
        $region62: #{tpu_custom_call.1} parent=59 // pred_check_branch
          %341 = sbr.rel (%p339) target = $region64
        $region63: #{tpu_custom_call.1} parent=59 // pred_region
          %343 = dma.done [#allocation3], 1024
        $region64: #{tpu_custom_call.1} parent=59 // pred_fallthru
          _
        %p344 = scmp.lt.s32.totalorder %s22, 1
        %s345 = scalar_select %p344, %s22, 1
        %s346 = smul.addr %s345, 5
        %s347 = smul.addr %s346, 8
        %s348 = scalar_lea.vmem %s0, %s347
        %p349 = pneg %p43
        %p350 = pneg %p40
        %p351 = scmp.lt.s32.totalorder %s22, 1
        %s352 = scalar_select %p351, %s22, 1
        %s353 = smul.addr %s352, 2
        %s354 = scalar_lea.vmem %s1, %s353
        %p355 = pneg %p69
        %p356 = pneg %p66
        %p357 = pneg %p90
        %p358 = pneg %p87
        %p359 = pneg %p111
        %p360 = pneg %p108
        %p361 = pneg %p132
        %p362 = pneg %p129
        %p363 = pneg %p153
        %p364 = pneg %p150
        %p365 = pneg %p174
        %p366 = pneg %p171
        %p367 = pneg %p195
        %p368 = pneg %p192
        %p369 = pneg %p216
        %p370 = pneg %p213
        %p371 = pneg %p237
        %p372 = pneg %p234
        %p373 = pneg %p263
        %p374 = pneg %p260
        %p375 = scmp.lt.s32.totalorder %s22, 1
        %s376 = scalar_select %p375, %s22, 1
        %s377 = smul.addr %s376, 5
        %s378 = smul.addr %s377, 4
        %s379 = scalar_lea.vmem %s10, %s378
        %p380 = scmp.lt.s32.totalorder %s22, 1
        %s381 = scalar_select %p380, %s22, 1
        %s382 = smul.addr %s381, 5
        %s383 = smul.addr %s382, 8
        %s384 = scalar_lea.vmem %s0, %s383
        %p385 = scmp.lt.s32.totalorder %s22, 1
        %s386 = scalar_select %p385, %s22, 1
        %s387 = smul.addr %s386, 2
        %s388 = scalar_lea.vmem %s1, %s387
        %p389 = scmp.lt.s32.totalorder %s22, 1
        %s390 = scalar_select %p389, %s22, 1
        %s391 = smul.addr %s390, 5
        %s392 = smul.addr %s391, 4
        %s393 = scalar_lea.vmem %s10, %s392
        %v395 = vld [vmem:[%s384] sm:$0xff]
        %v396 = vld [vmem:[%s384 + $0x8] sm:$0xff]
        %v397 = vld [vmem:[%s384 + $0x10] sm:$0xff]
        %v398 = vld [vmem:[%s384 + $0x18] sm:$0xff]
        %v399 = vld [vmem:[%s384 + $0x20] sm:$0x7]
        %v400 = vpack.c.bf16 %v395, %v395
        %v401 = vpack.c.bf16 %v396, %v396
        %v402 = vpack.c.bf16 %v397, %v397
        %v403 = vpack.c.bf16 %v398, %v398
        %v404 = vpack.c.bf16 %v399, %v399
        %v405 = vld [vmem:[%s2] sm:$0xff]
        %v406 = vld [vmem:[%s2 + $0x8] sm:$0xff]
        %v407 = vld [vmem:[%s3] sm:$0xff]
        %v408 = vld [vmem:[%s3 + $0x8] sm:$0xff]
        %v414 = vunpack.c.l.b16 %v400
        %v415 = vunpack.c.l.b16 %v401
        %v416 = vunpack.c.l.b16 %v402
        %v417 = vunpack.c.l.b16 %v403
        %v418 = vunpack.c.l.b16 %v404
        %v419 = vpack.c.b16 %v415, %v414
        %v420 = vpack.c.b16 %v417, %v416
        %v421 = vpack.c.b16 %v418, %v418
        %vm422 = vsmask.f32 7424
        %v424 = vshrl.u32 %v419, 16
        %v426 = vshll.u32 %v419, 16
        %v428 = vrot.slane %v426, 1
        %v429 = vor.u32 %v424, %v428
        %v431 = vshll.u32 %v420, 16
        %v433 = vrot.slane %v431, 1
        %v434 = vsel %vm422, %v429, %v433
        %v435 = vshrl.u32 %v420, 16
        %v437 = vor.u32 %v435, %v433
        %v439 = vshll.u32 %v421, 16
        %v441 = vrot.slane %v439, 1
        %v442 = vsel %vm422, %v437, %v441
        %v443 = vshrl.u32 %v421, 16
        %v445 = vor.u32 %v443, %v441
        %v448 = vunpack.c.l.b16 %v407
        %v449 = vunpack.c.h.b16 %v407
        %v450 = vunpack.c.l.b16 %v408
        %v451 = vunpack.c.h.b16 %v408
        %v452 = vpack.c.b16 %v450, %v448
        %v453 = vpack.c.b16 %v451, %v449
        %vm456 = vcmask 130048
        %v458 = vsel %vm456, %v434, 0
        %v461 = vsel %vm456, %v442, 0
        %v464 = vsel %vm456, %v445, 0
        %466 = vmatpush.bf16.msra.mxu0 0
        %467 = vmatpush.bf16.msra.mxu0 0
        %468 = vmatpush.bf16.msra.mxu0 0
        %469 = vmatpush.bf16.msra.mxu0 0
        %470 = vmatpush.bf16.msra.mxu0 0
        %471 = vmatpush.bf16.msra.mxu0 0
        %472 = vmatpush.bf16.msra.mxu0 0
        %473 = vmatpush.bf16.msra.mxu0 %v452
        %474 = vmatmul.bf16.gmra.mxu0 %v458
        %v475 = vpop.f32.mrf.mxu0
        %v476 = vadd.f32 0.0, %v475
        %v477 = vpop.f32.mrf.mxu0
        %v478 = vadd.f32 0.0, %v477
        %479 = vmatmul.bf16.gmra.mxu0 %v461
        %v480 = vpop.f32.mrf.mxu0
        %v481 = vadd.f32 0.0, %v480
        %v482 = vpop.f32.mrf.mxu0
        %v483 = vadd.f32 0.0, %v482
        %484 = vmatmul.bf16.gmra.mxu0 %v464
        %v485 = vpop.f32.mrf.mxu0
        %v486 = vadd.f32 0.0, %v485
        %v487 = vpop.f32.mrf.mxu0
        %488 = vdwg.mxu0
        %489 = vmatpush.bf16.msra.mxu0 0
        %490 = vmatpush.bf16.msra.mxu0 0
        %491 = vmatpush.bf16.msra.mxu0 0
        %492 = vmatpush.bf16.msra.mxu0 0
        %493 = vmatpush.bf16.msra.mxu0 0
        %494 = vmatpush.bf16.msra.mxu0 0
        %495 = vmatpush.bf16.msra.mxu0 0
        %496 = vmatpush.bf16.msra.mxu0 %v453
        %497 = vmatmul.bf16.gmra.mxu0 %v458
        %v498 = vpop.f32.mrf.mxu0
        %v499 = vadd.f32 0.0, %v498
        %v500 = vpop.f32.mrf.mxu0
        %v501 = vadd.f32 0.0, %v500
        %502 = vmatmul.bf16.gmra.mxu0 %v461
        %v503 = vpop.f32.mrf.mxu0
        %v504 = vadd.f32 0.0, %v503
        %v505 = vpop.f32.mrf.mxu0
        %v506 = vadd.f32 0.0, %v505
        %507 = vmatmul.bf16.gmra.mxu0 %v464
        %v508 = vpop.f32.mrf.mxu0
        %v509 = vadd.f32 0.0, %v508
        %v510 = vpop.f32.mrf.mxu0
        %511 = vdwg.mxu0
        %v514 = vunpack.c.l.b16 %v405
        %v515 = vunpack.c.h.b16 %v405
        %v516 = vunpack.c.l.b16 %v406
        %v517 = vunpack.c.h.b16 %v406
        %v518 = vpack.c.b16 %v516, %v514
        %v519 = vpack.c.b16 %v517, %v515
        %v522 = vsel %vm456, %v419, 0
        %v524 = vsel %vm456, %v420, 0
        %v526 = vsel %vm456, %v421, 0
        %528 = vmatpush.bf16.msra.mxu0 0
        %529 = vmatpush.bf16.msra.mxu0 0
        %530 = vmatpush.bf16.msra.mxu0 0
        %531 = vmatpush.bf16.msra.mxu0 0
        %532 = vmatpush.bf16.msra.mxu0 0
        %533 = vmatpush.bf16.msra.mxu0 0
        %534 = vmatpush.bf16.msra.mxu0 0
        %535 = vmatpush.bf16.msra.mxu0 %v518
        %536 = vmatmul.bf16.gmra.mxu0 %v522
        %v537 = vpop.f32.mrf.mxu0
        %v538 = vadd.f32 %v476, %v537
        %v539 = vpop.f32.mrf.mxu0
        %v540 = vadd.f32 %v478, %v539
        %541 = vmatmul.bf16.gmra.mxu0 %v524
        %v542 = vpop.f32.mrf.mxu0
        %v543 = vadd.f32 %v481, %v542
        %v544 = vpop.f32.mrf.mxu0
        %v545 = vadd.f32 %v483, %v544
        %546 = vmatmul.bf16.gmra.mxu0 %v526
        %v547 = vpop.f32.mrf.mxu0
        %v548 = vadd.f32 %v486, %v547
        %v549 = vpop.f32.mrf.mxu0
        %550 = vdwg.mxu0
        %551 = vmatpush.bf16.msra.mxu0 0
        %552 = vmatpush.bf16.msra.mxu0 0
        %553 = vmatpush.bf16.msra.mxu0 0
        %554 = vmatpush.bf16.msra.mxu0 0
        %555 = vmatpush.bf16.msra.mxu0 0
        %556 = vmatpush.bf16.msra.mxu0 0
        %557 = vmatpush.bf16.msra.mxu0 0
        %558 = vmatpush.bf16.msra.mxu0 %v519
        %559 = vmatmul.bf16.gmra.mxu0 %v522
        %v560 = vpop.f32.mrf.mxu0
        %v561 = vadd.f32 %v499, %v560
        %v562 = vpop.f32.mrf.mxu0
        %v563 = vadd.f32 %v501, %v562
        %564 = vmatmul.bf16.gmra.mxu0 %v524
        %v565 = vpop.f32.mrf.mxu0
        %v566 = vadd.f32 %v504, %v565
        %v567 = vpop.f32.mrf.mxu0
        %v568 = vadd.f32 %v506, %v567
        %569 = vmatmul.bf16.gmra.mxu0 %v526
        %v570 = vpop.f32.mrf.mxu0
        %v571 = vadd.f32 %v509, %v570
        %v572 = vpop.f32.mrf.mxu0
        %573 = vdwg.mxu0
        %v574 = vld [vmem:[%s388] sm:$0x3]
        %v576 = vperm.slane %v574, 0
        %v577 = vperm.slane %v574, 1
        %v580 = vadd.f32 %v538, %v576
        %v581 = vadd.f32 %v561, %v577
        %v582 = vadd.f32 %v540, %v576
        %v583 = vadd.f32 %v563, %v577
        %v584 = vadd.f32 %v543, %v576
        %v585 = vadd.f32 %v566, %v577
        %v586 = vadd.f32 %v545, %v576
        %v587 = vadd.f32 %v568, %v577
        %v588 = vadd.f32 %v548, %v576
        %v589 = vadd.f32 %v571, %v577
        %v590 = vmax.f32 %v580, 0.0
        %v591 = vmax.f32 %v581, 0.0
        %v592 = vmax.f32 %v582, 0.0
        %v593 = vmax.f32 %v583, 0.0
        %v594 = vmax.f32 %v584, 0.0
        %v595 = vmax.f32 %v585, 0.0
        %v596 = vmax.f32 %v586, 0.0
        %v597 = vmax.f32 %v587, 0.0
        %v598 = vmax.f32 %v588, 0.0
        %v599 = vmax.f32 %v589, 0.0
        %600 = vadd.xlane.f32.xlu0 %v591
        %v601 = vpop.xlane.xlu0 %600
        %602 = vadd.xlane.f32.xlu0 %v593
        %v603 = vpop.xlane.xlu0 %602
        %604 = vadd.xlane.f32.xlu0 %v595
        %v605 = vpop.xlane.xlu0 %604
        %606 = vadd.xlane.f32.xlu0 %v597
        %v607 = vpop.xlane.xlu0 %606
        %vm608 = vcmask 1041408
        %v609 = vsel %vm608, %v599, 0.0
        %610 = vadd.xlane.f32.xlu0 %v609
        %v611 = vpop.xlane.xlu0 %610
        %v612 = vmul.f32 %v591, %v591
        %v613 = vmul.f32 %v593, %v593
        %v614 = vmul.f32 %v595, %v595
        %v615 = vmul.f32 %v597, %v597
        %v616 = vmul.f32 %v599, %v599
        %617 = vadd.xlane.f32.xlu0 %v612
        %v618 = vpop.xlane.xlu0 %617
        %619 = vadd.xlane.f32.xlu0 %v613
        %v620 = vpop.xlane.xlu0 %619
        %621 = vadd.xlane.f32.xlu0 %v614
        %v622 = vpop.xlane.xlu0 %621
        %623 = vadd.xlane.f32.xlu0 %v615
        %v624 = vpop.xlane.xlu0 %623
        %v625 = vsel %vm608, %v616, 0.0
        %626 = vadd.xlane.f32.xlu0 %v625
        %v627 = vpop.xlane.xlu0 %626
        %v628 = vmul.f32 %v601, 0.03125
        %v629 = vmul.f32 %v603, 0.03125
        %v630 = vmul.f32 %v605, 0.03125
        %v631 = vmul.f32 %v607, 0.03125
        %v632 = vmul.f32 %v611, 0.03125
        %v633 = vmul.f32 %v601, %v628
        %v634 = vmul.f32 %v603, %v629
        %v635 = vmul.f32 %v605, %v630
        %v636 = vmul.f32 %v607, %v631
        %v637 = vmul.f32 %v611, %v632
        %v638 = vsub.f32 %v618, %v633
        %v639 = vsub.f32 %v620, %v634
        %v640 = vsub.f32 %v622, %v635
        %v641 = vsub.f32 %v624, %v636
        %v642 = vsub.f32 %v627, %v637
        %v643 = vmul.f32 %v638, 0.032258064
        %v644 = vmul.f32 %v639, 0.032258064
        %v645 = vmul.f32 %v640, 0.032258064
        %v646 = vmul.f32 %v641, 0.032258064
        %v647 = vmul.f32 %v642, 0.032258064
        %v648 = vmax.f32 %v643, 0.0
        %v649 = vmax.f32 %v644, 0.0
        %v650 = vmax.f32 %v645, 0.0
        %v651 = vmax.f32 %v646, 0.0
        %v652 = vmax.f32 %v647, 0.0
        %v653 = vrsqrt.pop %v648
        %v654 = vmul.f32 %v653, %v648
        %v655 = vmul.f32 %v654, %v653
        %v656 = vmul.f32 0.5, %v655
        %v657 = vsub.f32 1.5, %v656
        %v658 = vmul.f32 %v653, %v657
        %v659 = vmul.f32 %v648, %v658
        %vm660 = vcmp.eq.f32.partialorder %v648, inf
        %v661 = vsel %vm660, %v648, %v659
        %vm662 = vcmp.eq.f32.partialorder %v648, 0.0
        %v663 = vand.u32 %v648, 2147483648
        %v664 = vsel %vm662, %v663, %v661
        %v665 = vrsqrt.pop %v649
        %v666 = vmul.f32 %v665, %v649
        %v667 = vmul.f32 %v666, %v665
        %v668 = vmul.f32 0.5, %v667
        %v669 = vsub.f32 1.5, %v668
        %v670 = vmul.f32 %v665, %v669
        %v671 = vmul.f32 %v649, %v670
        %vm672 = vcmp.eq.f32.partialorder %v649, inf
        %v673 = vsel %vm672, %v649, %v671
        %vm674 = vcmp.eq.f32.partialorder %v649, 0.0
        %v675 = vand.u32 %v649, 2147483648
        %v676 = vsel %vm674, %v675, %v673
        %v677 = vrsqrt.pop %v650
        %v678 = vmul.f32 %v677, %v650
        %v679 = vmul.f32 %v678, %v677
        %v680 = vmul.f32 0.5, %v679
        %v681 = vsub.f32 1.5, %v680
        %v682 = vmul.f32 %v677, %v681
        %v683 = vmul.f32 %v650, %v682
        %vm684 = vcmp.eq.f32.partialorder %v650, inf
        %v685 = vsel %vm684, %v650, %v683
        %vm686 = vcmp.eq.f32.partialorder %v650, 0.0
        %v687 = vand.u32 %v650, 2147483648
        %v688 = vsel %vm686, %v687, %v685
        %v689 = vrsqrt.pop %v651
        %v690 = vmul.f32 %v689, %v651
        %v691 = vmul.f32 %v690, %v689
        %v692 = vmul.f32 0.5, %v691
        %v693 = vsub.f32 1.5, %v692
        %v694 = vmul.f32 %v689, %v693
        %v695 = vmul.f32 %v651, %v694
        %vm696 = vcmp.eq.f32.partialorder %v651, inf
        %v697 = vsel %vm696, %v651, %v695
        %vm698 = vcmp.eq.f32.partialorder %v651, 0.0
        %v699 = vand.u32 %v651, 2147483648
        %v700 = vsel %vm698, %v699, %v697
        %v701 = vrsqrt.pop %v652
        %v702 = vmul.f32 %v701, %v652
        %v703 = vmul.f32 %v702, %v701
        %v704 = vmul.f32 0.5, %v703
        %v705 = vsub.f32 1.5, %v704
        %v706 = vmul.f32 %v701, %v705
        %v707 = vmul.f32 %v652, %v706
        %vm708 = vcmp.eq.f32.partialorder %v652, inf
        %v709 = vsel %vm708, %v652, %v707
        %vm710 = vcmp.eq.f32.partialorder %v652, 0.0
        %v711 = vand.u32 %v652, 2147483648
        %v712 = vsel %vm710, %v711, %v709
        %v713 = vadd.f32 %v664, 1e-06
        %v714 = vadd.f32 %v676, 1e-06
        %v715 = vadd.f32 %v688, 1e-06
        %v716 = vadd.f32 %v700, 1e-06
        %v717 = vadd.f32 %v712, 1e-06
        %v718 = vrcp.pop %v713
        %v719 = vrcp.pop %v714
        %v720 = vrcp.pop %v715
        %v721 = vrcp.pop %v716
        %v722 = vrcp.pop %v717
        %v723 = vld [vmem:[%s4] sm:$0x1]
        %v724 = vsub.f32 %v591, %v628
        %v725 = vsub.f32 %v593, %v629
        %v726 = vsub.f32 %v595, %v630
        %v727 = vsub.f32 %v597, %v631
        %v728 = vsub.f32 %v599, %v632
        %v729 = vmul.f32 %v724, %v718
        %v730 = vmul.f32 %v725, %v719
        %v731 = vmul.f32 %v726, %v720
        %v732 = vmul.f32 %v727, %v721
        %v733 = vmul.f32 %v728, %v722
        %v735 = vperm.slane %v723, 0
        %v737 = vmul.f32 %v735, %v729
        %v738 = vmul.f32 %v735, %v730
        %v739 = vmul.f32 %v735, %v731
        %v740 = vmul.f32 %v735, %v732
        %v741 = vmul.f32 %v735, %v733
        %v742 = vld [vmem:[%s5] sm:$0x1]
        %v744 = vperm.slane %v742, 0
        %v746 = vadd.f32 %v737, %v744
        %v747 = vadd.f32 %v738, %v744
        %v748 = vadd.f32 %v739, %v744
        %v749 = vadd.f32 %v740, %v744
        %v750 = vadd.f32 %v741, %v744
        %v751 = vadd.f32 %v746, %v590
        %v752 = vadd.f32 %v747, %v592
        %v753 = vadd.f32 %v748, %v594
        %v754 = vadd.f32 %v749, %v596
        %v755 = vadd.f32 %v750, %v598
        %v756 = vpack.c.bf16 %v752, %v751
        %v757 = vpack.c.bf16 %v754, %v753
        %v758 = vpack.c.bf16 %v755, %v755
        %v759 = vld [vmem:[%s6] sm:$0xf]
        %v760 = vld [vmem:[%s6 + $0x4] sm:$0xf]
        %v761 = vld [vmem:[%s6 + $0x8] sm:$0xf]
        %v762 = vld [vmem:[%s6 + $0xc] sm:$0xf]
        %v763 = vld [vmem:[%s6 + $0x10] sm:$0xf]
        %v764 = vld [vmem:[%s6 + $0x14] sm:$0xf]
        %v765 = vld [vmem:[%s6 + $0x18] sm:$0xf]
        %v766 = vld [vmem:[%s6 + $0x1c] sm:$0xf]
        %v767 = vld [vmem:[%s6 + $0x20] sm:$0xf]
        %v768 = vld [vmem:[%s6 + $0x24] sm:$0xf]
        %v769 = vld [vmem:[%s6 + $0x28] sm:$0xf]
        %v770 = vld [vmem:[%s6 + $0x2c] sm:$0xf]
        %v771 = vld [vmem:[%s6 + $0x30] sm:$0xf]
        %v772 = vld [vmem:[%s6 + $0x34] sm:$0xf]
        %v773 = vld [vmem:[%s6 + $0x38] sm:$0xf]
        %v774 = vld [vmem:[%s6 + $0x3c] sm:$0xf]
        %v775 = vld [vmem:[%s7] sm:$0x1]
        %v777 = vperm.slane %v775, 0
        %v795 = vunpack.c.l.b16 %v759
        %v796 = vunpack.c.l.b16 %v760
        %v797 = vunpack.c.l.b16 %v761
        %v798 = vunpack.c.l.b16 %v762
        %v799 = vunpack.c.l.b16 %v763
        %v800 = vunpack.c.l.b16 %v764
        %v801 = vunpack.c.l.b16 %v765
        %v802 = vunpack.c.l.b16 %v766
        %v803 = vunpack.c.l.b16 %v767
        %v804 = vunpack.c.l.b16 %v768
        %v805 = vunpack.c.l.b16 %v769
        %v806 = vunpack.c.l.b16 %v770
        %v807 = vunpack.c.l.b16 %v771
        %v808 = vunpack.c.l.b16 %v772
        %v809 = vunpack.c.l.b16 %v773
        %v810 = vunpack.c.l.b16 %v774
        %v811 = vpack.c.b16 %v796, %v795
        %v812 = vpack.c.b16 %v798, %v797
        %v813 = vpack.c.b16 %v800, %v799
        %v814 = vpack.c.b16 %v802, %v801
        %v815 = vpack.c.b16 %v804, %v803
        %v816 = vpack.c.b16 %v806, %v805
        %v817 = vpack.c.b16 %v808, %v807
        %v818 = vpack.c.b16 %v810, %v809
        %827 = vmatpush.bf16.msra.mxu0 %v818
        %828 = vmatpush.bf16.msra.mxu0 %v817
        %829 = vmatpush.bf16.msra.mxu0 %v816
        %830 = vmatpush.bf16.msra.mxu0 %v815
        %831 = vmatpush.bf16.msra.mxu0 %v814
        %832 = vmatpush.bf16.msra.mxu0 %v813
        %833 = vmatpush.bf16.msra.mxu0 %v812
        %834 = vmatpush.bf16.msra.mxu0 %v811
        %835 = vmatmul.bf16.gmra.mxu0 %v756
        %v836 = vpop.f32.mrf.mxu0
        %v837 = vadd.f32 %v777, %v836
        %v838 = vpop.f32.mrf.mxu0
        %v839 = vadd.f32 %v777, %v838
        %840 = vmatmul.bf16.gmra.mxu0 %v757
        %v841 = vpop.f32.mrf.mxu0
        %v842 = vadd.f32 %v777, %v841
        %v843 = vpop.f32.mrf.mxu0
        %v844 = vadd.f32 %v777, %v843
        %845 = vmatmul.bf16.gmra.mxu0 %v758
        %v846 = vpop.f32.mrf.mxu0
        %v847 = vadd.f32 %v777, %v846
        %v848 = vpop.f32.mrf.mxu0
        %849 = vdwg.mxu0
        %v850 = vmax.f32 %v837, 0.0
        %v851 = vmax.f32 %v839, 0.0
        %v852 = vmax.f32 %v842, 0.0
        %v853 = vmax.f32 %v844, 0.0
        %v854 = vmax.f32 %v847, 0.0
        %v855 = vpack.c.bf16 %v851, %v850
        %v856 = vpack.c.bf16 %v853, %v852
        %v857 = vpack.c.bf16 %v854, %v854
        %v858 = vld [vmem:[#allocation2] sm:$0xf]
        %v859 = vld [vmem:[#allocation2 + $0x4] sm:$0xf]
        %v860 = vld [vmem:[#allocation2 + $0x8] sm:$0xf]
        %v861 = vld [vmem:[#allocation2 + $0xc] sm:$0xf]
        %v862 = vld [vmem:[#allocation2 + $0x10] sm:$0xf]
        %v863 = vld [vmem:[#allocation2 + $0x14] sm:$0xf]
        %v864 = vld [vmem:[#allocation2 + $0x18] sm:$0xf]
        %v865 = vld [vmem:[#allocation2 + $0x1c] sm:$0xf]
        %v866 = vld [vmem:[#allocation2 + $0x20] sm:$0xf]
        %v867 = vld [vmem:[#allocation2 + $0x24] sm:$0xf]
        %v868 = vld [vmem:[#allocation2 + $0x28] sm:$0xf]
        %v869 = vld [vmem:[#allocation2 + $0x2c] sm:$0xf]
        %v870 = vld [vmem:[#allocation2 + $0x30] sm:$0xf]
        %v871 = vld [vmem:[#allocation2 + $0x34] sm:$0xf]
        %v872 = vld [vmem:[#allocation2 + $0x38] sm:$0xf]
        %v873 = vld [vmem:[#allocation2 + $0x3c] sm:$0xf]
        %v874 = vld [vmem:[%s9] sm:$0x1]
        %v876 = vperm.slane %v874, 0
        %v894 = vunpack.c.l.b16 %v858
        %v895 = vunpack.c.l.b16 %v859
        %v896 = vunpack.c.l.b16 %v860
        %v897 = vunpack.c.l.b16 %v861
        %v898 = vunpack.c.l.b16 %v862
        %v899 = vunpack.c.l.b16 %v863
        %v900 = vunpack.c.l.b16 %v864
        %v901 = vunpack.c.l.b16 %v865
        %v902 = vunpack.c.l.b16 %v866
        %v903 = vunpack.c.l.b16 %v867
        %v904 = vunpack.c.l.b16 %v868
        %v905 = vunpack.c.l.b16 %v869
        %v906 = vunpack.c.l.b16 %v870
        %v907 = vunpack.c.l.b16 %v871
        %v908 = vunpack.c.l.b16 %v872
        %v909 = vunpack.c.l.b16 %v873
        %v910 = vpack.c.b16 %v895, %v894
        %v911 = vpack.c.b16 %v897, %v896
        %v912 = vpack.c.b16 %v899, %v898
        %v913 = vpack.c.b16 %v901, %v900
        %v914 = vpack.c.b16 %v903, %v902
        %v915 = vpack.c.b16 %v905, %v904
        %v916 = vpack.c.b16 %v907, %v906
        %v917 = vpack.c.b16 %v909, %v908
        %926 = vmatpush.bf16.msra.mxu0 %v917
        %927 = vmatpush.bf16.msra.mxu0 %v916
        %928 = vmatpush.bf16.msra.mxu0 %v915
        %929 = vmatpush.bf16.msra.mxu0 %v914
        %930 = vmatpush.bf16.msra.mxu0 %v913
        %931 = vmatpush.bf16.msra.mxu0 %v912
        %932 = vmatpush.bf16.msra.mxu0 %v911
        %933 = vmatpush.bf16.msra.mxu0 %v910
        %934 = vmatmul.bf16.gmra.mxu0 %v855
        %v935 = vpop.f32.mrf.mxu0
        %v936 = vadd.f32 %v876, %v935
        %v937 = vpop.f32.mrf.mxu0
        %v938 = vadd.f32 %v876, %v937
        %939 = vmatmul.bf16.gmra.mxu0 %v856
        %v940 = vpop.f32.mrf.mxu0
        %v941 = vadd.f32 %v876, %v940
        %v942 = vpop.f32.mrf.mxu0
        %v943 = vadd.f32 %v876, %v942
        %944 = vmatmul.bf16.gmra.mxu0 %v857
        %v945 = vpop.f32.mrf.mxu0
        %v946 = vadd.f32 %v876, %v945
        %v947 = vpop.f32.mrf.mxu0
        %948 = vdwg.mxu0
        %v949 = vadd.f32 %v936, %v751
        %v950 = vadd.f32 %v938, %v752
        %v951 = vadd.f32 %v941, %v753
        %v952 = vadd.f32 %v943, %v754
        %v953 = vadd.f32 %v946, %v755
        %v954 = vpack.c.bf16 %v949, %v949
        %v955 = vpack.c.bf16 %v950, %v950
        %v956 = vpack.c.bf16 %v951, %v951
        %v957 = vpack.c.bf16 %v952, %v952
        %v958 = vpack.c.bf16 %v953, %v953
        %959 = vst [vmem:[%s393] sm:$0xf] %v954
        %960 = vst [vmem:[%s393 + $0x4] sm:$0xf] %v955
        %961 = vst [vmem:[%s393 + $0x8] sm:$0xf] %v956
        %962 = vst [vmem:[%s393 + $0xc] sm:$0xf] %v957
        %963 = vst [vmem:[%s393 + $0x10] sm:$0x1] %v958
        %p964 = scmp.lt.s32.totalorder %s22, 1
        %s965 = scalar_select %p964, %s22, 1
        %s966 = smul.addr %s965, 5
        %s967 = smul.addr %s966, 4
        %s968 = scalar_lea.vmem %s10, %s967
        // Predicated region
        $region65: #{tpu_custom_call.1} parent=59 // pred_check
          %p969 = pneg %p260
        $region66: #{tpu_custom_call.1} parent=59 // pred_check_branch
          %971 = sbr.rel (%p969) target = $region68
        $region67: #{tpu_custom_call.1} parent=59 // pred_region
          _
        $region68: #{tpu_custom_call.1} parent=59 // pred_fallthru
          _
      $region60: #{tpu_custom_call.1} parent=5 // pred_fallthru
        _
      %p972 = scmp.le.s32.totalorder 2, %s17
      // Predicated region
      $region69: #{tpu_custom_call.1} parent=5 // pred_check
        %p973 = pneg %p972
      $region70: #{tpu_custom_call.1} parent=5 // pred_check_branch
        %975 = sbr.rel (%p973) target = $region72
      $region71: #{tpu_custom_call.1} parent=5 // pred_region
        %s976 = ssub.s32 %s17, 2
        // Predicated region
        $region73: #{tpu_custom_call.1} parent=71 // pred_check
          %p977 = pneg %p266
        $region74: #{tpu_custom_call.1} parent=71 // pred_check_branch
          %979 = sbr.rel (%p977) target = $region76
        $region75: #{tpu_custom_call.1} parent=71 // pred_region
          %p980 = scmp.lt.s32.totalorder %s23, 1
          %s981 = scalar_select %p980, %s23, 1
          %s982 = smul.addr %s981, 5
          %s983 = smul.addr %s982, 4
          %s984 = scalar_lea.vmem %s10, %s983
        $region76: #{tpu_custom_call.1} parent=71 // pred_fallthru
          _
      $region72: #{tpu_custom_call.1} parent=5 // pred_fallthru
        _
    $region6: #{tpu_custom_call.1} parent=1 // loop_footer
      %s21 = sadd.s32 1, %s17
    $region7: #{tpu_custom_call.1} parent=1 // loop_footer_branch
      %16 = sbr.rel target = $region3
    $region8: #{tpu_custom_call.1} parent=1 // loop_exit
      _
    %985 = vsyncpa [#allocation3], 1
    %s986 = scalar_lea.sflag [#allocation3], 1
    %987 = vsyncpa %s986, 1

</llo_original>
